<compile_context>
chip_gen: v7x
topology: tpu7x:2x2x1
jax: 0.10.0
libtpu: 0.0.40
codegen_flags: <defaults>
</compile_context>

<pallas_src>
import functools

import jax
import jax.numpy as jnp
from jax.experimental import pallas as pl
from jax.experimental.pallas import tpu as pltpu


# ----------------------------- glue (plain JAX) ------------------------------

def _div_sixteen_mul(v: int) -> int:
    v = int(v)
    return (v // 16) * 16 + (16 if v % 16 else 0)


def _patches_hw(x):
    """NCHW -> (u*v, N*C, 16*16) = (patch idx, feature, in-patch position).

    Same contents as the torch rearrange 'c b (u h) (v w) -> (h w) (u v) (b c)',
    but laid out patch-major / position-minor so the kernel reduces features
    over the sublane axis and keeps hw on the lane axis. Single transpose +
    reshape chain (no extra permute round-trip before the optional resize).
    """
    n, c, h, w = x.shape
    x = x.astype(jnp.float32)
    hp, wp = _div_sixteen_mul(h), _div_sixteen_mul(w)
    if (hp, wp) != (h, w):
        # torch F.interpolate(mode='bilinear', align_corners=False) upsample to
        # the next multiple of 16; bilinear is independent per (N, C) slice so
        # resizing before the permute is equivalent.
        # TODO(synk): exact equivalence vs F.interpolate only validated on
        # shapes that need no resize (H, W already multiples of 16).
        x = jax.image.resize(x, (n, c, hp, wp), method="bilinear")
    u, v = hp // 16, wp // 16
    x = x.reshape(n, c, u, 16, v, 16)
    x = jnp.transpose(x, (2, 4, 0, 1, 3, 5))        # (u, v, n, c, h, w)
    return x.reshape(u * v, n * c, 16 * 16)
    # TODO(synk): for very large feature maps the rearrange could be folded into
    # the kernel's index_map so NCHW is read from HBM only once.


# ------------------------------ Pallas kernel --------------------------------

def _cka_hw_kernel(t_ref, s_ref, out_ref, *, with_l2_norm, use_inter, p_valid):
    # t_ref / s_ref: (M, P, block_hw); out_ref: (1, block_hw) f32.
    M, P, _ = t_ref.shape
    f32 = jnp.float32
    # TODO(synk): for M >= ~16 replace the unrolled pair loops with
    # lax.fori_loop(..., unroll=True) over packed pairs or a block-diagonal
    # MXU matmul.

    def slab(ref, m):
        return ref[m].astype(f32)               # (P, block_hw)

    def feat_dot(a, b, w=None):
        p = a * b
        if w is not None:
            p = p * w
        # reduce over the feature (sublane) axis -> one lane-dense vreg
        return jnp.sum(p, axis=0, keepdims=True)   # (1, block_hw)

    # ---- intra-patch M x M Gram entries (symmetric, one vreg each) -----------
    gx = {}
    gy = {}
    for m in range(M):
        xm = slab(t_ref, m)
        ym = slab(s_ref, m)
        for n in range(m, M):
            gx[(m, n)] = feat_dot(xm, slab(t_ref, n))
            gy[(m, n)] = feat_dot(ym, slab(s_ref, n))

    def GX(m, n):
        return gx[(min(m, n), max(m, n))]

    def GY(m, n):
        return gy[(min(m, n), max(m, n))]

    if with_l2_norm:
        rx = [jax.lax.rsqrt(GX(m, m)) for m in range(M)]
        ry = [jax.lax.rsqrt(GY(m, m)) for m in range(M)]

    # ---- intra CKA -----------------------------------------------------------
    xy = 0.0
    xx = 0.0
    yy = 0.0
    for m in range(M):
        for n in range(M):
            gxmn = GX(m, n)
            gymn = GY(m, n)
            if with_l2_norm:          # row-normalized Gram, matches torch ref
                gxmn = gxmn * rx[m]
                gymn = gymn * ry[m]
            xy = xy + gxmn * gymn
            xx = xx + gxmn * gxmn
            yy = yy + gymn * gymn
    cka = xy * jax.lax.rsqrt(xx * yy)

    # ---- inter CKA (samples = feature columns), without (P, P) Grams --------
    if use_inter:
        if not with_l2_norm:
            # tr((X^T X)(Y^T Y)) = ||X Y^T||_F^2 ; denominators reuse xx, yy
            # since tr((X^T X)^2) = ||X X^T||_F^2 = xx (and likewise yy).
            xy_i = 0.0
            for m in range(M):
                xm = slab(t_ref, m)
                for n in range(M):
                    c_mn = feat_dot(xm, slab(s_ref, n))
                    xy_i = xy_i + c_mn * c_mn
            cka = cka + xy_i * jax.lax.rsqrt(xx * yy)
        else:
            # Row-normalized (P, P) Grams via per-feature diagonal weights:
            #   num = sum_{m,n} <x_m*y_n> * <x_m*y_n, rX*rY>
            #   den terms use GX/GY with weights rX*rX / rY*rY; both symmetric
            #   in (m, n), so only m <= n is computed (x2 off-diagonal).
            dX = 0.0
            dY = 0.0
            for m in range(M):
                xm = slab(t_ref, m)
                ym = slab(s_ref, m)
                dX = dX + xm * xm
                dY = dY + ym * ym
            rX = jax.lax.rsqrt(dX)
            rY = jax.lax.rsqrt(dY)
            if p_valid < P:
                # Zero the weights of zero-padded feature rows (exact).
                feat = jax.lax.broadcasted_iota(jnp.int32, (P, 1), 0)
                valid = feat < p_valid
                rX = jnp.where(valid, rX, 0.0)
                rY = jnp.where(valid, rY, 0.0)
            w_xy = rX * rY
            w_xx = rX * rX
            w_yy = rY * rY

            xy_i = 0.0
            for m in range(M):
                xm = slab(t_ref, m)
                for n in range(M):
                    pxy = xm * slab(s_ref, n)           # reused for both dots
                    c_mn = jnp.sum(pxy, axis=0, keepdims=True)
                    cw_mn = jnp.sum(pxy * w_xy, axis=0, keepdims=True)
                    xy_i = xy_i + c_mn * cw_mn

            xx_i = 0.0
            yy_i = 0.0
            for m in range(M):
                xm = slab(t_ref, m)
                ym = slab(s_ref, m)
                for n in range(m, M):
                    scale = 1.0 if n == m else 2.0
                    xx_i = xx_i + scale * GX(m, n) * feat_dot(xm, slab(t_ref, n), w_xx)
                    yy_i = yy_i + scale * GY(m, n) * feat_dot(ym, slab(s_ref, n), w_yy)
            cka = cka + xy_i * jax.lax.rsqrt(xx_i * yy_i)

    out_ref[...] = cka.astype(out_ref.dtype)


# --------------------------------- wrapper -----------------------------------

def _pick_block_hw(hw, m, p, itemsize):
    try:
        vmem_cap = int(pltpu.get_tpu_info().vmem_capacity_bytes)
    except Exception:  # conservative fallback (v7x-sized)
        vmem_cap = 64 * 1024 * 1024
    budget = int(0.7 * vmem_cap)
    per_hw_bytes = 2 * 2 * m * p * itemsize          # 2 inputs x 2 pipeline bufs
    max_hw = max(128, (budget // max(per_hw_bytes, 1)) // 128 * 128)
    block_hw = min(hw, max_hw)
    # Small-VMEM / multi-TC chips (v7x: 64 MiB, 2 TensorCores): keep >= 2 grid
    # steps so the "parallel" axis can shard across both cores.
    if vmem_cap <= 64 * 1024 * 1024 and hw >= 256:
        block_hw = min(block_hw, hw // 2)
    block_hw = max(128, (block_hw // 128) * 128)
    while hw % block_hw:
        block_hw -= 128
    return max(block_hw, 128), vmem_cap


def cka_rkd_hw_loss(student, teacher, *, intra_weight=15.0, inter_weight=None,
                    with_l2_norm=False, block_hw=None, input_dtype=jnp.float32):
    """Forward pass of CenterKernelAlignmentRKD_hw (combined_KD=False)."""
    assert student.shape[1] == teacher.shape[1]
    t_p = _patches_hw(teacher)                       # (M, P, hw)
    s_p = _patches_hw(student)
    assert t_p.shape == s_p.shape
    M, P, hw = t_p.shape

    # Pad features (sublane axis) to a multiple of 8; exact for all inner
    # products, and the l2-norm inter weights mask padded rows in-kernel.
    P_pad = -(-P // 8) * 8
    if P_pad != P:
        pad = ((0, 0), (0, P_pad - P), (0, 0))
        t_p = jnp.pad(t_p, pad)
        s_p = jnp.pad(s_p, pad)

    # input_dtype=jnp.bfloat16 halves DMA/VMEM on v6e/v7x (dots accumulate in
    # f32 inside the kernel); keep f32 on v5e (no native bf16 VALU).
    itemsize = jnp.dtype(input_dtype).itemsize
    t_p = t_p.astype(input_dtype)
    s_p = s_p.astype(input_dtype)

    if block_hw is None:
        block_hw, vmem_cap = _pick_block_hw(hw, M, P_pad, itemsize)
    else:
        block_hw = min(block_hw, hw)
        try:
            vmem_cap = int(pltpu.get_tpu_info().vmem_capacity_bytes)
        except Exception:
            vmem_cap = 64 * 1024 * 1024
    assert hw % block_hw == 0
    n_blocks = hw // block_hw
    use_inter = bool(inter_weight)                   # mirrors `if self.inter_weight:`

    need = 2 * 2 * M * P_pad * block_hw * itemsize + (1 << 20)
    vmem_limit = int(min(int(0.85 * vmem_cap), max(need + (8 << 20), 32 << 20)))

    kernel = functools.partial(
        _cka_hw_kernel, with_l2_norm=with_l2_norm, use_inter=use_inter,
        p_valid=P)

    cka_per_pos = pl.pallas_call(
        kernel,
        out_shape=jax.ShapeDtypeStruct((1, hw), jnp.float32),
        grid_spec=pltpu.PrefetchScalarGridSpec(
            num_scalar_prefetch=0,
            grid=(n_blocks,),
            in_specs=[
                pl.BlockSpec((M, P_pad, block_hw), lambda i: (0, 0, i)),
                pl.BlockSpec((M, P_pad, block_hw), lambda i: (0, 0, i)),
            ],
            out_specs=pl.BlockSpec((1, block_hw), lambda i: (0, i)),
        ),
        compiler_params=pltpu.CompilerParams(
            dimension_semantics=("parallel",),
            vmem_limit_bytes=vmem_limit,
        ),
    )(t_p, s_p)

    # loss = (1/hw) * sum_i intra_weight * (-cka_intra_i [+ -cka_inter_i]);
    # the reference also scales the inter term by intra_weight.
    return -(intra_weight / hw) * jnp.sum(cka_per_pos)
    # TODO(synk): combined_KD / KLDivergence branch not implemented (off by default).


# --------------------------- pure-JAX reference ------------------------------

def _cka_ref(x, y, with_l2_norm):
    gx = x @ x.T
    gy = y @ y.T
    if with_l2_norm:
        gx = gx / jnp.sqrt(jnp.diag(gx))[:, None]
        gy = gy / jnp.sqrt(jnp.diag(gy))[:, None]
    num = jnp.trace(gx @ gy.T)
    den = jnp.sqrt(jnp.trace(gx @ gx.T) * jnp.trace(gy @ gy.T))
    return num / den


def _ref_loss(student, teacher, intra_weight, inter_weight, with_l2_norm):
    t_p = _patches_hw(teacher)          # (M, P, hw)
    s_p = _patches_hw(student)
    hw = t_p.shape[2]
    cka = jax.vmap(lambda a, b: _cka_ref(a, b, with_l2_norm),
                   in_axes=(2, 2))(t_p, s_p)
    total = jnp.sum(intra_weight * (-cka))
    if inter_weight:
        cka_i = jax.vmap(lambda a, b: _cka_ref(a.T, b.T, with_l2_norm),
                         in_axes=(2, 2))(t_p, s_p)
        total = total + jnp.sum(intra_weight * (-cka_i))
    return total / hw


# ----------------------------------- main ------------------------------------

if __name__ == "__main__":
    key = jax.random.PRNGKey(0)
    k1, k2 = jax.random.split(key)
    # NCHW inputs; H=W=32 -> u=v=2 patches (M=4), hw=256, per-position matrices (4, N*C=128).
    N, C, H, W = 2, 64, 32, 32
    student = jax.random.normal(k1, (N, C, H, W), dtype=jnp.float32)
    teacher = jax.random.normal(k2, (N, C, H, W), dtype=jnp.float32)

    # Module defaults first (intra only, no l2 norm), then the other branches.
    configs = [
        dict(intra_weight=15.0, inter_weight=None, with_l2_norm=False),
        dict(intra_weight=15.0, inter_weight=1.0, with_l2_norm=False),
        dict(intra_weight=15.0, inter_weight=None, with_l2_norm=True),
        dict(intra_weight=15.0, inter_weight=1.0, with_l2_norm=True),
    ]
    for cfg in configs:
        loss = jax.block_until_ready(cka_rkd_hw_loss(student, teacher, **cfg))
        ref = jax.block_until_ready(_ref_loss(
            student, teacher, cfg["intra_weight"], cfg["inter_weight"],
            cfg["with_l2_norm"]))
        assert jnp.allclose(loss, ref, rtol=1e-3, atol=1e-3), (
            cfg, float(loss), float(ref))

    print("KERNEL_OK")
</pallas_src>

<mosaic_0001>
module attributes {stable_mosaic.version = 11 : i64} {
  func.func @_cka_hw_kernel(%arg0: i32, %arg1: memref<4x128x128xf32, #tpu.memory_space<vmem>>, %arg2: memref<4x128x128xf32, #tpu.memory_space<vmem>>, %arg3: memref<1x128xf32, #tpu.memory_space<vmem>>) attributes {dimension_semantics = [#tpu.dimension_semantics<parallel>], iteration_bounds = array<i64: 2>, scalar_prefetch = 0 : i64, scratch_operands = 0 : i64, tpu.core_type = #tpu.core_type<tc>, window_params = [{transform_indices = @transform_0, window_bounds = array<i64: 4, 128, 128>}, {transform_indices = @transform_1, window_bounds = array<i64: 4, 128, 128>}, {transform_indices = @transform_2, window_bounds = array<i64: 1, 128>}]} {
    %c0 = arith.constant 0 : index
    %c0_0 = arith.constant 0 : index
    %c0_1 = arith.constant 0 : index
    %0 = vector.load %arg1[%c0, %c0_0, %c0_1] : memref<4x128x128xf32, #tpu.memory_space<vmem>>, vector<1x128x128xf32>
    %1 = vector.shape_cast %0 : vector<1x128x128xf32> to vector<128x128xf32>
    %c0_2 = arith.constant 0 : index
    %c0_3 = arith.constant 0 : index
    %c0_4 = arith.constant 0 : index
    %2 = vector.load %arg2[%c0_2, %c0_3, %c0_4] : memref<4x128x128xf32, #tpu.memory_space<vmem>>, vector<1x128x128xf32>
    %3 = vector.shape_cast %2 : vector<1x128x128xf32> to vector<128x128xf32>
    %c0_5 = arith.constant 0 : index
    %c0_6 = arith.constant 0 : index
    %c0_7 = arith.constant 0 : index
    %4 = vector.load %arg1[%c0_5, %c0_6, %c0_7] : memref<4x128x128xf32, #tpu.memory_space<vmem>>, vector<1x128x128xf32>
    %5 = vector.shape_cast %4 : vector<1x128x128xf32> to vector<128x128xf32>
    %6 = arith.mulf %1, %5 : vector<128x128xf32>
    %cst = arith.constant dense<0.000000e+00> : vector<128xf32>
    %7 = vector.multi_reduction <add>, %6, %cst [0] : vector<128x128xf32> to vector<128xf32>
    %8 = vector.shape_cast %7 : vector<128xf32> to vector<1x128xf32>
    %c0_8 = arith.constant 0 : index
    %c0_9 = arith.constant 0 : index
    %c0_10 = arith.constant 0 : index
    %9 = vector.load %arg2[%c0_8, %c0_9, %c0_10] : memref<4x128x128xf32, #tpu.memory_space<vmem>>, vector<1x128x128xf32>
    %10 = vector.shape_cast %9 : vector<1x128x128xf32> to vector<128x128xf32>
    %11 = arith.mulf %3, %10 : vector<128x128xf32>
    %cst_11 = arith.constant dense<0.000000e+00> : vector<128xf32>
    %12 = vector.multi_reduction <add>, %11, %cst_11 [0] : vector<128x128xf32> to vector<128xf32>
    %13 = vector.shape_cast %12 : vector<128xf32> to vector<1x128xf32>
    %c1 = arith.constant 1 : index
    %c0_12 = arith.constant 0 : index
    %c0_13 = arith.constant 0 : index
    %14 = vector.load %arg1[%c1, %c0_12, %c0_13] : memref<4x128x128xf32, #tpu.memory_space<vmem>>, vector<1x128x128xf32>
    %15 = vector.shape_cast %14 : vector<1x128x128xf32> to vector<128x128xf32>
    %16 = arith.mulf %1, %15 : vector<128x128xf32>
    %cst_14 = arith.constant dense<0.000000e+00> : vector<128xf32>
    %17 = vector.multi_reduction <add>, %16, %cst_14 [0] : vector<128x128xf32> to vector<128xf32>
    %18 = vector.shape_cast %17 : vector<128xf32> to vector<1x128xf32>
    %c1_15 = arith.constant 1 : index
    %c0_16 = arith.constant 0 : index
    %c0_17 = arith.constant 0 : index
    %19 = vector.load %arg2[%c1_15, %c0_16, %c0_17] : memref<4x128x128xf32, #tpu.memory_space<vmem>>, vector<1x128x128xf32>
    %20 = vector.shape_cast %19 : vector<1x128x128xf32> to vector<128x128xf32>
    %21 = arith.mulf %3, %20 : vector<128x128xf32>
    %cst_18 = arith.constant dense<0.000000e+00> : vector<128xf32>
    %22 = vector.multi_reduction <add>, %21, %cst_18 [0] : vector<128x128xf32> to vector<128xf32>
    %23 = vector.shape_cast %22 : vector<128xf32> to vector<1x128xf32>
    %c2 = arith.constant 2 : index
    %c0_19 = arith.constant 0 : index
    %c0_20 = arith.constant 0 : index
    %24 = vector.load %arg1[%c2, %c0_19, %c0_20] : memref<4x128x128xf32, #tpu.memory_space<vmem>>, vector<1x128x128xf32>
    %25 = vector.shape_cast %24 : vector<1x128x128xf32> to vector<128x128xf32>
    %26 = arith.mulf %1, %25 : vector<128x128xf32>
    %cst_21 = arith.constant dense<0.000000e+00> : vector<128xf32>
    %27 = vector.multi_reduction <add>, %26, %cst_21 [0] : vector<128x128xf32> to vector<128xf32>
    %28 = vector.shape_cast %27 : vector<128xf32> to vector<1x128xf32>
    %c2_22 = arith.constant 2 : index
    %c0_23 = arith.constant 0 : index
    %c0_24 = arith.constant 0 : index
    %29 = vector.load %arg2[%c2_22, %c0_23, %c0_24] : memref<4x128x128xf32, #tpu.memory_space<vmem>>, vector<1x128x128xf32>
    %30 = vector.shape_cast %29 : vector<1x128x128xf32> to vector<128x128xf32>
    %31 = arith.mulf %3, %30 : vector<128x128xf32>
    %cst_25 = arith.constant dense<0.000000e+00> : vector<128xf32>
    %32 = vector.multi_reduction <add>, %31, %cst_25 [0] : vector<128x128xf32> to vector<128xf32>
    %33 = vector.shape_cast %32 : vector<128xf32> to vector<1x128xf32>
    %c3 = arith.constant 3 : index
    %c0_26 = arith.constant 0 : index
    %c0_27 = arith.constant 0 : index
    %34 = vector.load %arg1[%c3, %c0_26, %c0_27] : memref<4x128x128xf32, #tpu.memory_space<vmem>>, vector<1x128x128xf32>
    %35 = vector.shape_cast %34 : vector<1x128x128xf32> to vector<128x128xf32>
    %36 = arith.mulf %1, %35 : vector<128x128xf32>
    %cst_28 = arith.constant dense<0.000000e+00> : vector<128xf32>
    %37 = vector.multi_reduction <add>, %36, %cst_28 [0] : vector<128x128xf32> to vector<128xf32>
    %38 = vector.shape_cast %37 : vector<128xf32> to vector<1x128xf32>
    %c3_29 = arith.constant 3 : index
    %c0_30 = arith.constant 0 : index
    %c0_31 = arith.constant 0 : index
    %39 = vector.load %arg2[%c3_29, %c0_30, %c0_31] : memref<4x128x128xf32, #tpu.memory_space<vmem>>, vector<1x128x128xf32>
    %40 = vector.shape_cast %39 : vector<1x128x128xf32> to vector<128x128xf32>
    %41 = arith.mulf %3, %40 : vector<128x128xf32>
    %cst_32 = arith.constant dense<0.000000e+00> : vector<128xf32>
    %42 = vector.multi_reduction <add>, %41, %cst_32 [0] : vector<128x128xf32> to vector<128xf32>
    %43 = vector.shape_cast %42 : vector<128xf32> to vector<1x128xf32>
    %c1_33 = arith.constant 1 : index
    %c0_34 = arith.constant 0 : index
    %c0_35 = arith.constant 0 : index
    %44 = vector.load %arg1[%c1_33, %c0_34, %c0_35] : memref<4x128x128xf32, #tpu.memory_space<vmem>>, vector<1x128x128xf32>
    %45 = vector.shape_cast %44 : vector<1x128x128xf32> to vector<128x128xf32>
    %c1_36 = arith.constant 1 : index
    %c0_37 = arith.constant 0 : index
    %c0_38 = arith.constant 0 : index
    %46 = vector.load %arg2[%c1_36, %c0_37, %c0_38] : memref<4x128x128xf32, #tpu.memory_space<vmem>>, vector<1x128x128xf32>
    %47 = vector.shape_cast %46 : vector<1x128x128xf32> to vector<128x128xf32>
    %c1_39 = arith.constant 1 : index
    %c0_40 = arith.constant 0 : index
    %c0_41 = arith.constant 0 : index
    %48 = vector.load %arg1[%c1_39, %c0_40, %c0_41] : memref<4x128x128xf32, #tpu.memory_space<vmem>>, vector<1x128x128xf32>
    %49 = vector.shape_cast %48 : vector<1x128x128xf32> to vector<128x128xf32>
    %50 = arith.mulf %45, %49 : vector<128x128xf32>
    %cst_42 = arith.constant dense<0.000000e+00> : vector<128xf32>
    %51 = vector.multi_reduction <add>, %50, %cst_42 [0] : vector<128x128xf32> to vector<128xf32>
    %52 = vector.shape_cast %51 : vector<128xf32> to vector<1x128xf32>
    %c1_43 = arith.constant 1 : index
    %c0_44 = arith.constant 0 : index
    %c0_45 = arith.constant 0 : index
    %53 = vector.load %arg2[%c1_43, %c0_44, %c0_45] : memref<4x128x128xf32, #tpu.memory_space<vmem>>, vector<1x128x128xf32>
    %54 = vector.shape_cast %53 : vector<1x128x128xf32> to vector<128x128xf32>
    %55 = arith.mulf %47, %54 : vector<128x128xf32>
    %cst_46 = arith.constant dense<0.000000e+00> : vector<128xf32>
    %56 = vector.multi_reduction <add>, %55, %cst_46 [0] : vector<128x128xf32> to vector<128xf32>
    %57 = vector.shape_cast %56 : vector<128xf32> to vector<1x128xf32>
    %c2_47 = arith.constant 2 : index
    %c0_48 = arith.constant 0 : index
    %c0_49 = arith.constant 0 : index
    %58 = vector.load %arg1[%c2_47, %c0_48, %c0_49] : memref<4x128x128xf32, #tpu.memory_space<vmem>>, vector<1x128x128xf32>
    %59 = vector.shape_cast %58 : vector<1x128x128xf32> to vector<128x128xf32>
    %60 = arith.mulf %45, %59 : vector<128x128xf32>
    %cst_50 = arith.constant dense<0.000000e+00> : vector<128xf32>
    %61 = vector.multi_reduction <add>, %60, %cst_50 [0] : vector<128x128xf32> to vector<128xf32>
    %62 = vector.shape_cast %61 : vector<128xf32> to vector<1x128xf32>
    %c2_51 = arith.constant 2 : index
    %c0_52 = arith.constant 0 : index
    %c0_53 = arith.constant 0 : index
    %63 = vector.load %arg2[%c2_51, %c0_52, %c0_53] : memref<4x128x128xf32, #tpu.memory_space<vmem>>, vector<1x128x128xf32>
    %64 = vector.shape_cast %63 : vector<1x128x128xf32> to vector<128x128xf32>
    %65 = arith.mulf %47, %64 : vector<128x128xf32>
    %cst_54 = arith.constant dense<0.000000e+00> : vector<128xf32>
    %66 = vector.multi_reduction <add>, %65, %cst_54 [0] : vector<128x128xf32> to vector<128xf32>
    %67 = vector.shape_cast %66 : vector<128xf32> to vector<1x128xf32>
    %c3_55 = arith.constant 3 : index
    %c0_56 = arith.constant 0 : index
    %c0_57 = arith.constant 0 : index
    %68 = vector.load %arg1[%c3_55, %c0_56, %c0_57] : memref<4x128x128xf32, #tpu.memory_space<vmem>>, vector<1x128x128xf32>
    %69 = vector.shape_cast %68 : vector<1x128x128xf32> to vector<128x128xf32>
    %70 = arith.mulf %45, %69 : vector<128x128xf32>
    %cst_58 = arith.constant dense<0.000000e+00> : vector<128xf32>
    %71 = vector.multi_reduction <add>, %70, %cst_58 [0] : vector<128x128xf32> to vector<128xf32>
    %72 = vector.shape_cast %71 : vector<128xf32> to vector<1x128xf32>
    %c3_59 = arith.constant 3 : index
    %c0_60 = arith.constant 0 : index
    %c0_61 = arith.constant 0 : index
    %73 = vector.load %arg2[%c3_59, %c0_60, %c0_61] : memref<4x128x128xf32, #tpu.memory_space<vmem>>, vector<1x128x128xf32>
    %74 = vector.shape_cast %73 : vector<1x128x128xf32> to vector<128x128xf32>
    %75 = arith.mulf %47, %74 : vector<128x128xf32>
    %cst_62 = arith.constant dense<0.000000e+00> : vector<128xf32>
    %76 = vector.multi_reduction <add>, %75, %cst_62 [0] : vector<128x128xf32> to vector<128xf32>
    %77 = vector.shape_cast %76 : vector<128xf32> to vector<1x128xf32>
    %c2_63 = arith.constant 2 : index
    %c0_64 = arith.constant 0 : index
    %c0_65 = arith.constant 0 : index
    %78 = vector.load %arg1[%c2_63, %c0_64, %c0_65] : memref<4x128x128xf32, #tpu.memory_space<vmem>>, vector<1x128x128xf32>
    %79 = vector.shape_cast %78 : vector<1x128x128xf32> to vector<128x128xf32>
    %c2_66 = arith.constant 2 : index
    %c0_67 = arith.constant 0 : index
    %c0_68 = arith.constant 0 : index
    %80 = vector.load %arg2[%c2_66, %c0_67, %c0_68] : memref<4x128x128xf32, #tpu.memory_space<vmem>>, vector<1x128x128xf32>
    %81 = vector.shape_cast %80 : vector<1x128x128xf32> to vector<128x128xf32>
    %c2_69 = arith.constant 2 : index
    %c0_70 = arith.constant 0 : index
    %c0_71 = arith.constant 0 : index
    %82 = vector.load %arg1[%c2_69, %c0_70, %c0_71] : memref<4x128x128xf32, #tpu.memory_space<vmem>>, vector<1x128x128xf32>
    %83 = vector.shape_cast %82 : vector<1x128x128xf32> to vector<128x128xf32>
    %84 = arith.mulf %79, %83 : vector<128x128xf32>
    %cst_72 = arith.constant dense<0.000000e+00> : vector<128xf32>
    %85 = vector.multi_reduction <add>, %84, %cst_72 [0] : vector<128x128xf32> to vector<128xf32>
    %86 = vector.shape_cast %85 : vector<128xf32> to vector<1x128xf32>
    %c2_73 = arith.constant 2 : index
    %c0_74 = arith.constant 0 : index
    %c0_75 = arith.constant 0 : index
    %87 = vector.load %arg2[%c2_73, %c0_74, %c0_75] : memref<4x128x128xf32, #tpu.memory_space<vmem>>, vector<1x128x128xf32>
    %88 = vector.shape_cast %87 : vector<1x128x128xf32> to vector<128x128xf32>
    %89 = arith.mulf %81, %88 : vector<128x128xf32>
    %cst_76 = arith.constant dense<0.000000e+00> : vector<128xf32>
    %90 = vector.multi_reduction <add>, %89, %cst_76 [0] : vector<128x128xf32> to vector<128xf32>
    %91 = vector.shape_cast %90 : vector<128xf32> to vector<1x128xf32>
    %c3_77 = arith.constant 3 : index
    %c0_78 = arith.constant 0 : index
    %c0_79 = arith.constant 0 : index
    %92 = vector.load %arg1[%c3_77, %c0_78, %c0_79] : memref<4x128x128xf32, #tpu.memory_space<vmem>>, vector<1x128x128xf32>
    %93 = vector.shape_cast %92 : vector<1x128x128xf32> to vector<128x128xf32>
    %94 = arith.mulf %79, %93 : vector<128x128xf32>
    %cst_80 = arith.constant dense<0.000000e+00> : vector<128xf32>
    %95 = vector.multi_reduction <add>, %94, %cst_80 [0] : vector<128x128xf32> to vector<128xf32>
    %96 = vector.shape_cast %95 : vector<128xf32> to vector<1x128xf32>
    %c3_81 = arith.constant 3 : index
    %c0_82 = arith.constant 0 : index
    %c0_83 = arith.constant 0 : index
    %97 = vector.load %arg2[%c3_81, %c0_82, %c0_83] : memref<4x128x128xf32, #tpu.memory_space<vmem>>, vector<1x128x128xf32>
    %98 = vector.shape_cast %97 : vector<1x128x128xf32> to vector<128x128xf32>
    %99 = arith.mulf %81, %98 : vector<128x128xf32>
    %cst_84 = arith.constant dense<0.000000e+00> : vector<128xf32>
    %100 = vector.multi_reduction <add>, %99, %cst_84 [0] : vector<128x128xf32> to vector<128xf32>
    %101 = vector.shape_cast %100 : vector<128xf32> to vector<1x128xf32>
    %c3_85 = arith.constant 3 : index
    %c0_86 = arith.constant 0 : index
    %c0_87 = arith.constant 0 : index
    %102 = vector.load %arg1[%c3_85, %c0_86, %c0_87] : memref<4x128x128xf32, #tpu.memory_space<vmem>>, vector<1x128x128xf32>
    %103 = vector.shape_cast %102 : vector<1x128x128xf32> to vector<128x128xf32>
    %c3_88 = arith.constant 3 : index
    %c0_89 = arith.constant 0 : index
    %c0_90 = arith.constant 0 : index
    %104 = vector.load %arg2[%c3_88, %c0_89, %c0_90] : memref<4x128x128xf32, #tpu.memory_space<vmem>>, vector<1x128x128xf32>
    %105 = vector.shape_cast %104 : vector<1x128x128xf32> to vector<128x128xf32>
    %c3_91 = arith.constant 3 : index
    %c0_92 = arith.constant 0 : index
    %c0_93 = arith.constant 0 : index
    %106 = vector.load %arg1[%c3_91, %c0_92, %c0_93] : memref<4x128x128xf32, #tpu.memory_space<vmem>>, vector<1x128x128xf32>
    %107 = vector.shape_cast %106 : vector<1x128x128xf32> to vector<128x128xf32>
    %108 = arith.mulf %103, %107 : vector<128x128xf32>
    %cst_94 = arith.constant dense<0.000000e+00> : vector<128xf32>
    %109 = vector.multi_reduction <add>, %108, %cst_94 [0] : vector<128x128xf32> to vector<128xf32>
    %110 = vector.shape_cast %109 : vector<128xf32> to vector<1x128xf32>
    %c3_95 = arith.constant 3 : index
    %c0_96 = arith.constant 0 : index
    %c0_97 = arith.constant 0 : index
    %111 = vector.load %arg2[%c3_95, %c0_96, %c0_97] : memref<4x128x128xf32, #tpu.memory_space<vmem>>, vector<1x128x128xf32>
    %112 = vector.shape_cast %111 : vector<1x128x128xf32> to vector<128x128xf32>
    %113 = arith.mulf %105, %112 : vector<128x128xf32>
    %cst_98 = arith.constant dense<0.000000e+00> : vector<128xf32>
    %114 = vector.multi_reduction <add>, %113, %cst_98 [0] : vector<128x128xf32> to vector<128xf32>
    %115 = vector.shape_cast %114 : vector<128xf32> to vector<1x128xf32>
    %116 = arith.mulf %8, %13 : vector<1x128xf32>
    %cst_99 = arith.constant 0.000000e+00 : f32
    %117 = vector.broadcast %cst_99 : f32 to vector<1x128xf32>
    %118 = arith.addf %117, %116 : vector<1x128xf32>
    %119 = arith.mulf %8, %8 : vector<1x128xf32>
    %cst_100 = arith.constant 0.000000e+00 : f32
    %120 = vector.broadcast %cst_100 : f32 to vector<1x128xf32>
    %121 = arith.addf %120, %119 : vector<1x128xf32>
    %122 = arith.mulf %13, %13 : vector<1x128xf32>
    %cst_101 = arith.constant 0.000000e+00 : f32
    %123 = vector.broadcast %cst_101 : f32 to vector<1x128xf32>
    %124 = arith.addf %123, %122 : vector<1x128xf32>
    %125 = arith.mulf %18, %23 : vector<1x128xf32>
    %126 = arith.addf %118, %125 : vector<1x128xf32>
    %127 = arith.mulf %18, %18 : vector<1x128xf32>
    %128 = arith.addf %121, %127 : vector<1x128xf32>
    %129 = arith.mulf %23, %23 : vector<1x128xf32>
    %130 = arith.addf %124, %129 : vector<1x128xf32>
    %131 = arith.mulf %28, %33 : vector<1x128xf32>
    %132 = arith.addf %126, %131 : vector<1x128xf32>
    %133 = arith.mulf %28, %28 : vector<1x128xf32>
    %134 = arith.addf %128, %133 : vector<1x128xf32>
    %135 = arith.mulf %33, %33 : vector<1x128xf32>
    %136 = arith.addf %130, %135 : vector<1x128xf32>
    %137 = arith.mulf %38, %43 : vector<1x128xf32>
    %138 = arith.addf %132, %137 : vector<1x128xf32>
    %139 = arith.mulf %38, %38 : vector<1x128xf32>
    %140 = arith.addf %134, %139 : vector<1x128xf32>
    %141 = arith.mulf %43, %43 : vector<1x128xf32>
    %142 = arith.addf %136, %141 : vector<1x128xf32>
    %143 = arith.mulf %18, %23 : vector<1x128xf32>
    %144 = arith.addf %138, %143 : vector<1x128xf32>
    %145 = arith.mulf %18, %18 : vector<1x128xf32>
    %146 = arith.addf %140, %145 : vector<1x128xf32>
    %147 = arith.mulf %23, %23 : vector<1x128xf32>
    %148 = arith.addf %142, %147 : vector<1x128xf32>
    %149 = arith.mulf %52, %57 : vector<1x128xf32>
    %150 = arith.addf %144, %149 : vector<1x128xf32>
    %151 = arith.mulf %52, %52 : vector<1x128xf32>
    %152 = arith.addf %146, %151 : vector<1x128xf32>
    %153 = arith.mulf %57, %57 : vector<1x128xf32>
    %154 = arith.addf %148, %153 : vector<1x128xf32>
    %155 = arith.mulf %62, %67 : vector<1x128xf32>
    %156 = arith.addf %150, %155 : vector<1x128xf32>
    %157 = arith.mulf %62, %62 : vector<1x128xf32>
    %158 = arith.addf %152, %157 : vector<1x128xf32>
    %159 = arith.mulf %67, %67 : vector<1x128xf32>
    %160 = arith.addf %154, %159 : vector<1x128xf32>
    %161 = arith.mulf %72, %77 : vector<1x128xf32>
    %162 = arith.addf %156, %161 : vector<1x128xf32>
    %163 = arith.mulf %72, %72 : vector<1x128xf32>
    %164 = arith.addf %158, %163 : vector<1x128xf32>
    %165 = arith.mulf %77, %77 : vector<1x128xf32>
    %166 = arith.addf %160, %165 : vector<1x128xf32>
    %167 = arith.mulf %28, %33 : vector<1x128xf32>
    %168 = arith.addf %162, %167 : vector<1x128xf32>
    %169 = arith.mulf %28, %28 : vector<1x128xf32>
    %170 = arith.addf %164, %169 : vector<1x128xf32>
    %171 = arith.mulf %33, %33 : vector<1x128xf32>
    %172 = arith.addf %166, %171 : vector<1x128xf32>
    %173 = arith.mulf %62, %67 : vector<1x128xf32>
    %174 = arith.addf %168, %173 : vector<1x128xf32>
    %175 = arith.mulf %62, %62 : vector<1x128xf32>
    %176 = arith.addf %170, %175 : vector<1x128xf32>
    %177 = arith.mulf %67, %67 : vector<1x128xf32>
    %178 = arith.addf %172, %177 : vector<1x128xf32>
    %179 = arith.mulf %86, %91 : vector<1x128xf32>
    %180 = arith.addf %174, %179 : vector<1x128xf32>
    %181 = arith.mulf %86, %86 : vector<1x128xf32>
    %182 = arith.addf %176, %181 : vector<1x128xf32>
    %183 = arith.mulf %91, %91 : vector<1x128xf32>
    %184 = arith.addf %178, %183 : vector<1x128xf32>
    %185 = arith.mulf %96, %101 : vector<1x128xf32>
    %186 = arith.addf %180, %185 : vector<1x128xf32>
    %187 = arith.mulf %96, %96 : vector<1x128xf32>
    %188 = arith.addf %182, %187 : vector<1x128xf32>
    %189 = arith.mulf %101, %101 : vector<1x128xf32>
    %190 = arith.addf %184, %189 : vector<1x128xf32>
    %191 = arith.mulf %38, %43 : vector<1x128xf32>
    %192 = arith.addf %186, %191 : vector<1x128xf32>
    %193 = arith.mulf %38, %38 : vector<1x128xf32>
    %194 = arith.addf %188, %193 : vector<1x128xf32>
    %195 = arith.mulf %43, %43 : vector<1x128xf32>
    %196 = arith.addf %190, %195 : vector<1x128xf32>
    %197 = arith.mulf %72, %77 : vector<1x128xf32>
    %198 = arith.addf %192, %197 : vector<1x128xf32>
    %199 = arith.mulf %72, %72 : vector<1x128xf32>
    %200 = arith.addf %194, %199 : vector<1x128xf32>
    %201 = arith.mulf %77, %77 : vector<1x128xf32>
    %202 = arith.addf %196, %201 : vector<1x128xf32>
    %203 = arith.mulf %96, %101 : vector<1x128xf32>
    %204 = arith.addf %198, %203 : vector<1x128xf32>
    %205 = arith.mulf %96, %96 : vector<1x128xf32>
    %206 = arith.addf %200, %205 : vector<1x128xf32>
    %207 = arith.mulf %101, %101 : vector<1x128xf32>
    %208 = arith.addf %202, %207 : vector<1x128xf32>
    %209 = arith.mulf %110, %115 : vector<1x128xf32>
    %210 = arith.addf %204, %209 : vector<1x128xf32>
    %211 = arith.mulf %110, %110 : vector<1x128xf32>
    %212 = arith.addf %206, %211 : vector<1x128xf32>
    %213 = arith.mulf %115, %115 : vector<1x128xf32>
    %214 = arith.addf %208, %213 : vector<1x128xf32>
    %215 = arith.mulf %212, %214 : vector<1x128xf32>
    %216 = math.rsqrt %215 : vector<1x128xf32>
    %217 = arith.mulf %210, %216 : vector<1x128xf32>
    %c0_102 = arith.constant 0 : index
    %c0_103 = arith.constant 0 : index
    %218 = vector.load %arg3[%c0_102, %c0_103] : memref<1x128xf32, #tpu.memory_space<vmem>>, vector<1x128xf32>
    tpu.vector_store %arg3[%c0_102, %c0_103], %217 {strides = array<i32>} : memref<1x128xf32, #tpu.memory_space<vmem>>, vector<1x128xf32>,
    return
  }
  func.func @transform_0(%arg0: i32) -> (i32, i32, i32) {
    %c0_i32 = arith.constant 0 : i32
    %c0_i32_0 = arith.constant 0 : i32
    %c0_i32_1 = arith.constant 0 : i32
    return %c0_i32, %c0_i32_0, %arg0 : i32, i32, i32
  }
  func.func @transform_1(%arg0: i32) -> (i32, i32, i32) {
    %c0_i32 = arith.constant 0 : i32
    %c0_i32_0 = arith.constant 0 : i32
    %c0_i32_1 = arith.constant 0 : i32
    return %c0_i32, %c0_i32_0, %arg0 : i32, i32, i32
  }
  func.func @transform_2(%arg0: i32) -> (i32, i32) {
    %c0_i32 = arith.constant 0 : i32
    %c0_i32_0 = arith.constant 0 : i32
    return %c0_i32, %arg0 : i32, i32
  }
}

</mosaic_0001>

<llo_original>
// kernel: tpu_custom_call.1
$region0: #{tpu_custom_call.1}
  #allocation0 [shape = 'u32[]', space=smem, size = 0x4, offset = 0x4, fixed_abs, tag = 'smem constant byte address 0x4 - core index']
  #allocation1 [shape = 'u32[144,128]{1,0:T(1,128)}', space=vmem, size = 0x12000, scoped, tag = 'internal scratch']
  %s0 = inlined_call_operand.hbm [shape: f32[4,128,256], index: 0, kind: input, shape index: {}]
  %s1 = inlined_call_operand.hbm [shape: f32[4,128,256], index: 1, kind: input, shape index: {}]
  %s2 = inlined_call_operand.hbm [shape: f32[1,256], index: 2, kind: output, shape index: {}]
  %s3 = sld [smem:[#allocation0]]
  $region49: #{tpu_custom_call.1} parent=0
    _
  %s5 = ssub.s32 1, %s3
  %s6 = scalar_select 0, %s5, %s3
  $region1: #{tpu_custom_call.1} parent=0
    #allocation2 [shape = 'u8[524288]{0}', space=vmem, size = 0x80000, scoped, tag = 'input window, operand 0']
    #allocation3 [shape = 's32[2]{0}', space=sflag, size = 0x8, scoped, tag = 'scoped memory for tpu_custom_call.1']
    #allocation4 [shape = 's32[2]{0}', space=sflag, size = 0x8, scoped, tag = 'scoped memory for tpu_custom_call.1']
    #allocation5 [shape = 'u8[524288]{0}', space=vmem, size = 0x80000, scoped, tag = 'input window, operand 1']
    #allocation6 [shape = 's32[2]{0}', space=sflag, size = 0x8, scoped, tag = 'scoped memory for tpu_custom_call.1']
    #allocation7 [shape = 'u8[1024]{0}', space=vmem, size = 0x400, scoped, tag = 'output window, operand 0']
    %7 = vsyncpa [#allocation3], 0
    %s8 = scalar_lea.sflag [#allocation3], 1
    %9 = vsyncpa %s8, 0
    %10 = vsyncpa [#allocation6], 0
    %s11 = scalar_lea.sflag [#allocation6], 1
    %12 = vsyncpa %s11, 0
    %13 = vsyncpa [#allocation4], 0
    %s14 = scalar_lea.sflag [#allocation4], 1
    %15 = vsyncpa %s14, 0
    loop: start=0, step=1, limit=4
    $region2: #{tpu_custom_call.1} parent=1 // loop_pre_header
      _
    $region3: #{tpu_custom_call.1} parent=1 // loop_header
      %s17 = sphi 0, %s21
      %p18 = scmp.ge.s32.totalorder %s17, 4
      %s27 = sphi 0, %s29
      %s30 = sphi 0, %s27
      %s31 = sphi 0, %s30
      %s47 = sphi 0, %s31
      %s53 = sphi 0, %s55
      %s56 = sphi 0, %s53
      %s57 = sphi 0, %s56
      %s73 = sphi 0, %s57
      %s79 = sphi 0, %s81
      %s82 = sphi 0, %s79
      %s83 = sphi 0, %s82
      %s99 = sphi 0, %s83
    $region4: #{tpu_custom_call.1} parent=1 // loop_header_branch
      %20 = sbr.rel (%p18) target = $region8
    $region5: #{tpu_custom_call.1} parent=1 // loop_body
      %s22 = ssub.s32 %s17, 1
      %s23 = ssub.s32 %s17, 2
      %s24 = sadd.s32 %s17, 1
      %s25 = ssub.s32 %s17, %s24
      %p26 = scmp.eq.s32.totalorder %s25, 0
      %s28 = sadd.s32 %s27, 1
      %s29 = scalar_select %p26, %s27, %s28
      %p32 = pneg %p26
      %p33 = scmp.eq.s32.totalorder %s17, 1
      %p34 = por %p32, %p33
      %p35 = scmp.ne.s32.totalorder %s27, %s30
      %p36 = scmp.eq.s32.totalorder %s17, 0
      %p37 = por %p35, %p36
      %p38 = scmp.ne.s32.totalorder %s27, %s30
      %p39 = scmp.eq.s32.totalorder %s22, 1
      %p40 = por %p38, %p39
      %p41 = scmp.ne.s32.totalorder %s30, %s31
      %p42 = scmp.eq.s32.totalorder %s22, 0
      %p43 = por %p41, %p42
      %p44 = scmp.ne.s32.totalorder %s30, %s31
      %p45 = scmp.eq.s32.totalorder %s23, 1
      %p46 = por %p44, %p45
      %p48 = scmp.ne.s32.totalorder %s31, %s47
      %p49 = scmp.eq.s32.totalorder %s23, 0
      %p50 = por %p48, %p49
      %s51 = ssub.s32 %s17, %s24
      %p52 = scmp.eq.s32.totalorder %s51, 0
      %s54 = sadd.s32 %s53, 1
      %s55 = scalar_select %p52, %s53, %s54
      %p58 = pneg %p52
      %p59 = scmp.eq.s32.totalorder %s17, 1
      %p60 = por %p58, %p59
      %p61 = scmp.ne.s32.totalorder %s53, %s56
      %p62 = scmp.eq.s32.totalorder %s17, 0
      %p63 = por %p61, %p62
      %p64 = scmp.ne.s32.totalorder %s53, %s56
      %p65 = scmp.eq.s32.totalorder %s22, 1
      %p66 = por %p64, %p65
      %p67 = scmp.ne.s32.totalorder %s56, %s57
      %p68 = scmp.eq.s32.totalorder %s22, 0
      %p69 = por %p67, %p68
      %p70 = scmp.ne.s32.totalorder %s56, %s57
      %p71 = scmp.eq.s32.totalorder %s23, 1
      %p72 = por %p70, %p71
      %p74 = scmp.ne.s32.totalorder %s57, %s73
      %p75 = scmp.eq.s32.totalorder %s23, 0
      %p76 = por %p74, %p75
      %s77 = ssub.s32 %s17, %s24
      %p78 = scmp.eq.s32.totalorder %s77, 0
      %s80 = sadd.s32 %s79, 1
      %s81 = scalar_select %p78, %s79, %s80
      %p84 = pneg %p78
      %p85 = scmp.eq.s32.totalorder %s17, 1
      %p86 = por %p84, %p85
      %p87 = scmp.ne.s32.totalorder %s79, %s82
      %p88 = scmp.eq.s32.totalorder %s17, 0
      %p89 = por %p87, %p88
      %p90 = scmp.ne.s32.totalorder %s79, %s82
      %p91 = scmp.eq.s32.totalorder %s22, 1
      %p92 = por %p90, %p91
      %p93 = scmp.ne.s32.totalorder %s82, %s83
      %p94 = scmp.eq.s32.totalorder %s22, 0
      %p95 = por %p93, %p94
      %p96 = scmp.ne.s32.totalorder %s82, %s83
      %p97 = scmp.eq.s32.totalorder %s23, 1
      %p98 = por %p96, %p97
      %p100 = scmp.ne.s32.totalorder %s83, %s99
      %p101 = scmp.eq.s32.totalorder %s23, 0
      %p102 = por %p100, %p101
      %p103 = scmp.le.s32.totalorder 1, %s17
      %p104 = scmp.lt.s32.totalorder %s17, 3
      %p105 = pnand %p103, %p104
      %p106 = pneg %p105
      // Predicated region
      $region9: #{tpu_custom_call.1} parent=5 // pred_check
        _
      $region10: #{tpu_custom_call.1} parent=5 // pred_check_branch
        %108 = sbr.rel (%p105) target = $region12
      $region11: #{tpu_custom_call.1} parent=5 // pred_region
        %s109 = ssub.s32 %s17, 1
      $region12: #{tpu_custom_call.1} parent=5 // pred_fallthru
        _
      %p110 = scmp.lt.s32.totalorder %s17, 2
      // Predicated region
      $region13: #{tpu_custom_call.1} parent=5 // pred_check
        %p111 = pneg %p110
      $region14: #{tpu_custom_call.1} parent=5 // pred_check_branch
        %113 = sbr.rel (%p111) target = $region16
      $region15: #{tpu_custom_call.1} parent=5 // pred_region
        // Predicated region
        $region17: #{tpu_custom_call.1} parent=15 // pred_check
          %p114 = pneg %p37
        $region18: #{tpu_custom_call.1} parent=15 // pred_check_branch
          %116 = sbr.rel (%p114) target = $region20
        $region19: #{tpu_custom_call.1} parent=15 // pred_region
          %s117 = sand.u32 %s27, 1
          %s118 = scalar_lea.sflag [#allocation3], %s117
          %s119 = sand.u32 %s27, 1
          %s120 = smul.addr %s119, 512
          %s121 = scalar_lea.vmem [#allocation2], %s120
          %s123 = ssub.s32 8192, 8192
          %124 = vsyncadd %s118, %s123
          %s125 = smul.addr %s17, 128
          %s126 = scalar_lea.hbm %s0, %s125
          %s127 = sshll.u32 %s121, 4
          %s128 = int_to_ptr.vmem [resolvable:$true] %s127
          %133 = dma.hbm_to_vmem [thread:$0]  %s126, 8192, %s128, %s118, 256, 128, 8
        $region20: #{tpu_custom_call.1} parent=15 // pred_fallthru
          _
        // Predicated region
        $region21: #{tpu_custom_call.1} parent=15 // pred_check
          %p134 = pneg %p63
        $region22: #{tpu_custom_call.1} parent=15 // pred_check_branch
          %136 = sbr.rel (%p134) target = $region24
        $region23: #{tpu_custom_call.1} parent=15 // pred_region
          %s137 = sand.u32 %s53, 1
          %s138 = scalar_lea.sflag [#allocation6], %s137
          %s139 = sand.u32 %s53, 1
          %s140 = smul.addr %s139, 512
          %s141 = scalar_lea.vmem [#allocation5], %s140
          %s143 = ssub.s32 8192, 8192
          %144 = vsyncadd %s138, %s143
          %s145 = smul.addr %s17, 128
          %s146 = scalar_lea.hbm %s1, %s145
          %s147 = sshll.u32 %s141, 4
          %s148 = int_to_ptr.vmem [resolvable:$true] %s147
          %153 = dma.hbm_to_vmem [thread:$0]  %s146, 8192, %s148, %s138, 256, 128, 8
        $region24: #{tpu_custom_call.1} parent=15 // pred_fallthru
          _
      $region16: #{tpu_custom_call.1} parent=5 // pred_fallthru
        _
      %p154 = scmp.le.s32.totalorder 1, %s17
      %p155 = scmp.lt.s32.totalorder %s17, 3
      %p156 = pnand %p154, %p155
      %p157 = pneg %p156
      // Predicated region
      $region25: #{tpu_custom_call.1} parent=5 // pred_check
        _
      $region26: #{tpu_custom_call.1} parent=5 // pred_check_branch
        %159 = sbr.rel (%p156) target = $region28
      $region27: #{tpu_custom_call.1} parent=5 // pred_region
        %s160 = ssub.s32 %s17, 1
        %s161 = sand.u32 %s30, 1
        %s162 = scalar_lea.sflag [#allocation3], %s161
        %s163 = sand.u32 %s30, 1
        %s164 = smul.addr %s163, 512
        %s165 = scalar_lea.vmem [#allocation2], %s164
        // Predicated region
        $region29: #{tpu_custom_call.1} parent=27 // pred_check
          %p166 = pneg %p43
        $region30: #{tpu_custom_call.1} parent=27 // pred_check_branch
          %168 = sbr.rel (%p166) target = $region32
        $region31: #{tpu_custom_call.1} parent=27 // pred_region
          %169 = dma.done %s162, 8192
        $region32: #{tpu_custom_call.1} parent=27 // pred_fallthru
          _
        %s170 = sand.u32 %s56, 1
        %s171 = scalar_lea.sflag [#allocation6], %s170
        %s172 = sand.u32 %s56, 1
        %s173 = smul.addr %s172, 512
        %s174 = scalar_lea.vmem [#allocation5], %s173
        // Predicated region
        $region33: #{tpu_custom_call.1} parent=27 // pred_check
          %p175 = pneg %p69
        $region34: #{tpu_custom_call.1} parent=27 // pred_check_branch
          %177 = sbr.rel (%p175) target = $region36
        $region35: #{tpu_custom_call.1} parent=27 // pred_region
          %178 = dma.done %s171, 8192
        $region36: #{tpu_custom_call.1} parent=27 // pred_fallthru
          _
        %s179 = sand.u32 %s30, 1
        %s180 = scalar_lea.sflag [#allocation3], %s179
        %s181 = sand.u32 %s30, 1
        %s182 = smul.addr %s181, 512
        %s183 = scalar_lea.vmem [#allocation2], %s182
        %p184 = pneg %p43
        %p185 = pneg %p40
        %s186 = sand.u32 %s56, 1
        %s187 = scalar_lea.sflag [#allocation6], %s186
        %s188 = sand.u32 %s56, 1
        %s189 = smul.addr %s188, 512
        %s190 = scalar_lea.vmem [#allocation5], %s189
        %p191 = pneg %p69
        %p192 = pneg %p66
        %p193 = pneg %p95
        %p194 = pneg %p92
        %s195 = sand.u32 %s82, 1
        %s196 = scalar_lea.sflag [#allocation4], %s195
        %s197 = sand.u32 %s82, 1
        %s198 = scalar_lea.vmem [#allocation7], %s197
        %v199 = vld [vmem:[%s165] sm:$0xff]
        %v200 = vld [vmem:[%s165 + $0x8] sm:$0xff]
        %v201 = vld [vmem:[%s165 + $0x10] sm:$0xff]
        %v202 = vld [vmem:[%s165 + $0x18] sm:$0xff]
        %v203 = vld [vmem:[%s165 + $0x20] sm:$0xff]
        %v204 = vld [vmem:[%s165 + $0x28] sm:$0xff]
        %v205 = vld [vmem:[%s165 + $0x30] sm:$0xff]
        %v206 = vld [vmem:[%s165 + $0x38] sm:$0xff]
        %v207 = vld [vmem:[%s165 + $0x40] sm:$0xff]
        %v208 = vld [vmem:[%s165 + $0x48] sm:$0xff]
        %v209 = vld [vmem:[%s165 + $0x50] sm:$0xff]
        %v210 = vld [vmem:[%s165 + $0x58] sm:$0xff]
        %v211 = vld [vmem:[%s165 + $0x60] sm:$0xff]
        %v212 = vld [vmem:[%s165 + $0x68] sm:$0xff]
        %v213 = vld [vmem:[%s165 + $0x70] sm:$0xff]
        %v214 = vld [vmem:[%s165 + $0x78] sm:$0xff]
        %v215 = vld [vmem:[%s174] sm:$0xff]
        %v216 = vld [vmem:[%s174 + $0x8] sm:$0xff]
        %v217 = vld [vmem:[%s174 + $0x10] sm:$0xff]
        %v218 = vld [vmem:[%s174 + $0x18] sm:$0xff]
        %v219 = vld [vmem:[%s174 + $0x20] sm:$0xff]
        %v220 = vld [vmem:[%s174 + $0x28] sm:$0xff]
        %v221 = vld [vmem:[%s174 + $0x30] sm:$0xff]
        %v222 = vld [vmem:[%s174 + $0x38] sm:$0xff]
        %v223 = vld [vmem:[%s174 + $0x40] sm:$0xff]
        %v224 = vld [vmem:[%s174 + $0x48] sm:$0xff]
        %v225 = vld [vmem:[%s174 + $0x50] sm:$0xff]
        %v226 = vld [vmem:[%s174 + $0x58] sm:$0xff]
        %v227 = vld [vmem:[%s174 + $0x60] sm:$0xff]
        %v228 = vld [vmem:[%s174 + $0x68] sm:$0xff]
        %v229 = vld [vmem:[%s174 + $0x70] sm:$0xff]
        %v230 = vld [vmem:[%s174 + $0x78] sm:$0xff]
        %v231 = vmul.f32 %v199, %v199
        %v232 = vmul.f32 %v200, %v200
        %v233 = vmul.f32 %v201, %v201
        %v234 = vmul.f32 %v202, %v202
        %v235 = vmul.f32 %v203, %v203
        %v236 = vmul.f32 %v204, %v204
        %v237 = vmul.f32 %v205, %v205
        %v238 = vmul.f32 %v206, %v206
        %v239 = vmul.f32 %v207, %v207
        %v240 = vmul.f32 %v208, %v208
        %v241 = vmul.f32 %v209, %v209
        %v242 = vmul.f32 %v210, %v210
        %v243 = vmul.f32 %v211, %v211
        %v244 = vmul.f32 %v212, %v212
        %v245 = vmul.f32 %v213, %v213
        %v246 = vmul.f32 %v214, %v214
        %v247 = vadd.f32 %v231, %v232
        %v248 = vadd.f32 %v247, %v233
        %v249 = vadd.f32 %v248, %v234
        %v250 = vadd.f32 %v249, %v235
        %v251 = vadd.f32 %v250, %v236
        %v252 = vadd.f32 %v251, %v237
        %v253 = vadd.f32 %v252, %v238
        %v254 = vadd.f32 %v253, %v239
        %v255 = vadd.f32 %v254, %v240
        %v256 = vadd.f32 %v255, %v241
        %v257 = vadd.f32 %v256, %v242
        %v258 = vadd.f32 %v257, %v243
        %v259 = vadd.f32 %v258, %v244
        %v260 = vadd.f32 %v259, %v245
        %v261 = vadd.f32 %v260, %v246
        %v262 = vrot.slane %v261, 4
        %v263 = vadd.f32 %v261, %v262
        %v264 = vrot.slane %v263, 2
        %v265 = vadd.f32 %v263, %v264
        %v266 = vrot.slane %v265, 1
        %v267 = vadd.f32 %v265, %v266
        %v268 = vmul.f32 %v215, %v215
        %v269 = vmul.f32 %v216, %v216
        %v270 = vmul.f32 %v217, %v217
        %v271 = vmul.f32 %v218, %v218
        %v272 = vmul.f32 %v219, %v219
        %v273 = vmul.f32 %v220, %v220
        %v274 = vmul.f32 %v221, %v221
        %v275 = vmul.f32 %v222, %v222
        %v276 = vmul.f32 %v223, %v223
        %v277 = vmul.f32 %v224, %v224
        %v278 = vmul.f32 %v225, %v225
        %v279 = vmul.f32 %v226, %v226
        %v280 = vmul.f32 %v227, %v227
        %v281 = vmul.f32 %v228, %v228
        %v282 = vmul.f32 %v229, %v229
        %v283 = vmul.f32 %v230, %v230
        %v284 = vadd.f32 %v268, %v269
        %v285 = vadd.f32 %v284, %v270
        %v286 = vadd.f32 %v285, %v271
        %v287 = vadd.f32 %v286, %v272
        %v288 = vadd.f32 %v287, %v273
        %v289 = vadd.f32 %v288, %v274
        %v290 = vadd.f32 %v289, %v275
        %v291 = vadd.f32 %v290, %v276
        %v292 = vadd.f32 %v291, %v277
        %v293 = vadd.f32 %v292, %v278
        %v294 = vadd.f32 %v293, %v279
        %v295 = vadd.f32 %v294, %v280
        %v296 = vadd.f32 %v295, %v281
        %v297 = vadd.f32 %v296, %v282
        %v298 = vadd.f32 %v297, %v283
        %v299 = vrot.slane %v298, 4
        %v300 = vadd.f32 %v298, %v299
        %v301 = vrot.slane %v300, 2
        %v302 = vadd.f32 %v300, %v301
        %v303 = vrot.slane %v302, 1
        %v304 = vadd.f32 %v302, %v303
        %s305 = scalar_lea.vmem %s165, 128 [#allocation2]
        %v306 = vld [vmem:[%s305] sm:$0xff]
        %v307 = vld [vmem:[%s305 + $0x8] sm:$0xff]
        %v308 = vld [vmem:[%s305 + $0x10] sm:$0xff]
        %v309 = vld [vmem:[%s305 + $0x18] sm:$0xff]
        %v310 = vld [vmem:[%s305 + $0x20] sm:$0xff]
        %v311 = vld [vmem:[%s305 + $0x28] sm:$0xff]
        %v312 = vld [vmem:[%s305 + $0x30] sm:$0xff]
        %v313 = vld [vmem:[%s305 + $0x38] sm:$0xff]
        %v314 = vld [vmem:[%s305 + $0x40] sm:$0xff]
        %v315 = vld [vmem:[%s305 + $0x48] sm:$0xff]
        %v316 = vld [vmem:[%s305 + $0x50] sm:$0xff]
        %v317 = vld [vmem:[%s305 + $0x58] sm:$0xff]
        %v318 = vld [vmem:[%s305 + $0x60] sm:$0xff]
        %v319 = vld [vmem:[%s305 + $0x68] sm:$0xff]
        %v320 = vld [vmem:[%s305 + $0x70] sm:$0xff]
        %v321 = vld [vmem:[%s305 + $0x78] sm:$0xff]
        %v322 = vmul.f32 %v199, %v306
        %v323 = vmul.f32 %v200, %v307
        %v324 = vmul.f32 %v201, %v308
        %v325 = vmul.f32 %v202, %v309
        %v326 = vmul.f32 %v203, %v310
        %v327 = vmul.f32 %v204, %v311
        %v328 = vmul.f32 %v205, %v312
        %v329 = vmul.f32 %v206, %v313
        %v330 = vmul.f32 %v207, %v314
        %v331 = vmul.f32 %v208, %v315
        %v332 = vmul.f32 %v209, %v316
        %v333 = vmul.f32 %v210, %v317
        %v334 = vmul.f32 %v211, %v318
        %v335 = vmul.f32 %v212, %v319
        %v336 = vmul.f32 %v213, %v320
        %v337 = vmul.f32 %v214, %v321
        %v338 = vadd.f32 %v322, %v323
        %v339 = vadd.f32 %v338, %v324
        %v340 = vadd.f32 %v339, %v325
        %v341 = vadd.f32 %v340, %v326
        %v342 = vadd.f32 %v341, %v327
        %v343 = vadd.f32 %v342, %v328
        %v344 = vadd.f32 %v343, %v329
        %v345 = vadd.f32 %v344, %v330
        %v346 = vadd.f32 %v345, %v331
        %v347 = vadd.f32 %v346, %v332
        %v348 = vadd.f32 %v347, %v333
        %v349 = vadd.f32 %v348, %v334
        %v350 = vadd.f32 %v349, %v335
        %v351 = vadd.f32 %v350, %v336
        %v352 = vadd.f32 %v351, %v337
        %v353 = vrot.slane %v352, 4
        %v354 = vadd.f32 %v352, %v353
        %v355 = vrot.slane %v354, 2
        %v356 = vadd.f32 %v354, %v355
        %v357 = vrot.slane %v356, 1
        %v358 = vadd.f32 %v356, %v357
        %s359 = scalar_lea.vmem %s174, 128 [#allocation5]
        %v360 = vld [vmem:[%s359] sm:$0xff]
        %v361 = vld [vmem:[%s359 + $0x8] sm:$0xff]
        %v362 = vld [vmem:[%s359 + $0x10] sm:$0xff]
        %v363 = vld [vmem:[%s359 + $0x18] sm:$0xff]
        %v364 = vld [vmem:[%s359 + $0x20] sm:$0xff]
        %v365 = vld [vmem:[%s359 + $0x28] sm:$0xff]
        %v366 = vld [vmem:[%s359 + $0x30] sm:$0xff]
        %v367 = vld [vmem:[%s359 + $0x38] sm:$0xff]
        %v368 = vld [vmem:[%s359 + $0x40] sm:$0xff]
        %v369 = vld [vmem:[%s359 + $0x48] sm:$0xff]
        %v370 = vld [vmem:[%s359 + $0x50] sm:$0xff]
        %v371 = vld [vmem:[%s359 + $0x58] sm:$0xff]
        %v372 = vld [vmem:[%s359 + $0x60] sm:$0xff]
        %v373 = vld [vmem:[%s359 + $0x68] sm:$0xff]
        %v374 = vld [vmem:[%s359 + $0x70] sm:$0xff]
        %v375 = vld [vmem:[%s359 + $0x78] sm:$0xff]
        %v376 = vmul.f32 %v215, %v360
        %v377 = vmul.f32 %v216, %v361
        %v378 = vmul.f32 %v217, %v362
        %v379 = vmul.f32 %v218, %v363
        %v380 = vmul.f32 %v219, %v364
        %v381 = vmul.f32 %v220, %v365
        %v382 = vmul.f32 %v221, %v366
        %v383 = vmul.f32 %v222, %v367
        %v384 = vmul.f32 %v223, %v368
        %v385 = vmul.f32 %v224, %v369
        %v386 = vmul.f32 %v225, %v370
        %v387 = vmul.f32 %v226, %v371
        %v388 = vmul.f32 %v227, %v372
        %v389 = vmul.f32 %v228, %v373
        %v390 = vmul.f32 %v229, %v374
        %v391 = vmul.f32 %v230, %v375
        %v392 = vadd.f32 %v376, %v377
        %v393 = vadd.f32 %v392, %v378
        %v394 = vadd.f32 %v393, %v379
        %v395 = vadd.f32 %v394, %v380
        %v396 = vadd.f32 %v395, %v381
        %v397 = vadd.f32 %v396, %v382
        %v398 = vadd.f32 %v397, %v383
        %v399 = vadd.f32 %v398, %v384
        %v400 = vadd.f32 %v399, %v385
        %v401 = vadd.f32 %v400, %v386
        %v402 = vadd.f32 %v401, %v387
        %v403 = vadd.f32 %v402, %v388
        %v404 = vadd.f32 %v403, %v389
        %v405 = vadd.f32 %v404, %v390
        %v406 = vadd.f32 %v405, %v391
        %v407 = vrot.slane %v406, 4
        %v408 = vadd.f32 %v406, %v407
        %v409 = vrot.slane %v408, 2
        %v410 = vadd.f32 %v408, %v409
        %v411 = vrot.slane %v410, 1
        %v412 = vadd.f32 %v410, %v411
        %s413 = scalar_lea.vmem %s165, 256 [#allocation2]
        %v414 = vld [vmem:[%s413] sm:$0xff]
        %v415 = vld [vmem:[%s413 + $0x8] sm:$0xff]
        %v416 = vld [vmem:[%s413 + $0x10] sm:$0xff]
        %v417 = vld [vmem:[%s413 + $0x18] sm:$0xff]
        %v418 = vld [vmem:[%s413 + $0x20] sm:$0xff]
        %v419 = vld [vmem:[%s413 + $0x28] sm:$0xff]
        %v420 = vld [vmem:[%s413 + $0x30] sm:$0xff]
        %v421 = vld [vmem:[%s413 + $0x38] sm:$0xff]
        %v422 = vld [vmem:[%s413 + $0x40] sm:$0xff]
        %v423 = vld [vmem:[%s413 + $0x48] sm:$0xff]
        %v424 = vld [vmem:[%s413 + $0x50] sm:$0xff]
        %v425 = vld [vmem:[%s413 + $0x58] sm:$0xff]
        %v426 = vld [vmem:[%s413 + $0x60] sm:$0xff]
        %v427 = vld [vmem:[%s413 + $0x68] sm:$0xff]
        %v428 = vld [vmem:[%s413 + $0x70] sm:$0xff]
        %v429 = vld [vmem:[%s413 + $0x78] sm:$0xff]
        %v430 = vmul.f32 %v199, %v414
        %v431 = vmul.f32 %v200, %v415
        %v432 = vmul.f32 %v201, %v416
        %v433 = vmul.f32 %v202, %v417
        %v434 = vmul.f32 %v203, %v418
        %v435 = vmul.f32 %v204, %v419
        %v436 = vmul.f32 %v205, %v420
        %v437 = vmul.f32 %v206, %v421
        %v438 = vmul.f32 %v207, %v422
        %v439 = vmul.f32 %v208, %v423
        %v440 = vmul.f32 %v209, %v424
        %v441 = vmul.f32 %v210, %v425
        %v442 = vmul.f32 %v211, %v426
        %v443 = vmul.f32 %v212, %v427
        %v444 = vmul.f32 %v213, %v428
        %v445 = vmul.f32 %v214, %v429
        %v446 = vadd.f32 %v430, %v431
        %v447 = vadd.f32 %v446, %v432
        %v448 = vadd.f32 %v447, %v433
        %v449 = vadd.f32 %v448, %v434
        %v450 = vadd.f32 %v449, %v435
        %v451 = vadd.f32 %v450, %v436
        %v452 = vadd.f32 %v451, %v437
        %v453 = vadd.f32 %v452, %v438
        %v454 = vadd.f32 %v453, %v439
        %v455 = vadd.f32 %v454, %v440
        %v456 = vadd.f32 %v455, %v441
        %v457 = vadd.f32 %v456, %v442
        %v458 = vadd.f32 %v457, %v443
        %v459 = vadd.f32 %v458, %v444
        %v460 = vadd.f32 %v459, %v445
        %v461 = vrot.slane %v460, 4
        %v462 = vadd.f32 %v460, %v461
        %v463 = vrot.slane %v462, 2
        %v464 = vadd.f32 %v462, %v463
        %v465 = vrot.slane %v464, 1
        %v466 = vadd.f32 %v464, %v465
        %s467 = scalar_lea.vmem %s174, 256 [#allocation5]
        %v468 = vld [vmem:[%s467] sm:$0xff]
        %v469 = vld [vmem:[%s467 + $0x8] sm:$0xff]
        %v470 = vld [vmem:[%s467 + $0x10] sm:$0xff]
        %v471 = vld [vmem:[%s467 + $0x18] sm:$0xff]
        %v472 = vld [vmem:[%s467 + $0x20] sm:$0xff]
        %v473 = vld [vmem:[%s467 + $0x28] sm:$0xff]
        %v474 = vld [vmem:[%s467 + $0x30] sm:$0xff]
        %v475 = vld [vmem:[%s467 + $0x38] sm:$0xff]
        %v476 = vld [vmem:[%s467 + $0x40] sm:$0xff]
        %v477 = vld [vmem:[%s467 + $0x48] sm:$0xff]
        %v478 = vld [vmem:[%s467 + $0x50] sm:$0xff]
        %v479 = vld [vmem:[%s467 + $0x58] sm:$0xff]
        %v480 = vld [vmem:[%s467 + $0x60] sm:$0xff]
        %v481 = vld [vmem:[%s467 + $0x68] sm:$0xff]
        %v482 = vld [vmem:[%s467 + $0x70] sm:$0xff]
        %v483 = vld [vmem:[%s467 + $0x78] sm:$0xff]
        %v484 = vmul.f32 %v215, %v468
        %v485 = vmul.f32 %v216, %v469
        %v486 = vmul.f32 %v217, %v470
        %v487 = vmul.f32 %v218, %v471
        %v488 = vmul.f32 %v219, %v472
        %v489 = vmul.f32 %v220, %v473
        %v490 = vmul.f32 %v221, %v474
        %v491 = vmul.f32 %v222, %v475
        %v492 = vmul.f32 %v223, %v476
        %v493 = vmul.f32 %v224, %v477
        %v494 = vmul.f32 %v225, %v478
        %v495 = vmul.f32 %v226, %v479
        %v496 = vmul.f32 %v227, %v480
        %v497 = vmul.f32 %v228, %v481
        %v498 = vmul.f32 %v229, %v482
        %v499 = vmul.f32 %v230, %v483
        %v500 = vadd.f32 %v484, %v485
        %v501 = vadd.f32 %v500, %v486
        %v502 = vadd.f32 %v501, %v487
        %v503 = vadd.f32 %v502, %v488
        %v504 = vadd.f32 %v503, %v489
        %v505 = vadd.f32 %v504, %v490
        %v506 = vadd.f32 %v505, %v491
        %v507 = vadd.f32 %v506, %v492
        %v508 = vadd.f32 %v507, %v493
        %v509 = vadd.f32 %v508, %v494
        %v510 = vadd.f32 %v509, %v495
        %v511 = vadd.f32 %v510, %v496
        %v512 = vadd.f32 %v511, %v497
        %v513 = vadd.f32 %v512, %v498
        %v514 = vadd.f32 %v513, %v499
        %v515 = vrot.slane %v514, 4
        %v516 = vadd.f32 %v514, %v515
        %v517 = vrot.slane %v516, 2
        %v518 = vadd.f32 %v516, %v517
        %v519 = vrot.slane %v518, 1
        %v520 = vadd.f32 %v518, %v519
        %s521 = scalar_lea.vmem %s165, 384 [#allocation2]
        %v522 = vld [vmem:[%s521] sm:$0xff]
        %v523 = vld [vmem:[%s521 + $0x8] sm:$0xff]
        %v524 = vld [vmem:[%s521 + $0x10] sm:$0xff]
        %v525 = vld [vmem:[%s521 + $0x18] sm:$0xff]
        %v526 = vld [vmem:[%s521 + $0x20] sm:$0xff]
        %v527 = vld [vmem:[%s521 + $0x28] sm:$0xff]
        %v528 = vld [vmem:[%s521 + $0x30] sm:$0xff]
        %v529 = vld [vmem:[%s521 + $0x38] sm:$0xff]
        %v530 = vld [vmem:[%s521 + $0x40] sm:$0xff]
        %v531 = vld [vmem:[%s521 + $0x48] sm:$0xff]
        %v532 = vld [vmem:[%s521 + $0x50] sm:$0xff]
        %v533 = vld [vmem:[%s521 + $0x58] sm:$0xff]
        %v534 = vld [vmem:[%s521 + $0x60] sm:$0xff]
        %v535 = vld [vmem:[%s521 + $0x68] sm:$0xff]
        %v536 = vld [vmem:[%s521 + $0x70] sm:$0xff]
        %v537 = vld [vmem:[%s521 + $0x78] sm:$0xff]
        %v538 = vmul.f32 %v199, %v522
        %v539 = vmul.f32 %v200, %v523
        %v540 = vmul.f32 %v201, %v524
        %v541 = vmul.f32 %v202, %v525
        %v542 = vmul.f32 %v203, %v526
        %v543 = vmul.f32 %v204, %v527
        %v544 = vmul.f32 %v205, %v528
        %v545 = vmul.f32 %v206, %v529
        %v546 = vmul.f32 %v207, %v530
        %v547 = vmul.f32 %v208, %v531
        %v548 = vmul.f32 %v209, %v532
        %v549 = vmul.f32 %v210, %v533
        %v550 = vmul.f32 %v211, %v534
        %v551 = vmul.f32 %v212, %v535
        %v552 = vmul.f32 %v213, %v536
        %v553 = vmul.f32 %v214, %v537
        %v554 = vadd.f32 %v538, %v539
        %v555 = vadd.f32 %v554, %v540
        %v556 = vadd.f32 %v555, %v541
        %v557 = vadd.f32 %v556, %v542
        %v558 = vadd.f32 %v557, %v543
        %v559 = vadd.f32 %v558, %v544
        %v560 = vadd.f32 %v559, %v545
        %v561 = vadd.f32 %v560, %v546
        %v562 = vadd.f32 %v561, %v547
        %v563 = vadd.f32 %v562, %v548
        %v564 = vadd.f32 %v563, %v549
        %v565 = vadd.f32 %v564, %v550
        %v566 = vadd.f32 %v565, %v551
        %v567 = vadd.f32 %v566, %v552
        %v568 = vadd.f32 %v567, %v553
        %v569 = vrot.slane %v568, 4
        %v570 = vadd.f32 %v568, %v569
        %v571 = vrot.slane %v570, 2
        %v572 = vadd.f32 %v570, %v571
        %v573 = vrot.slane %v572, 1
        %v574 = vadd.f32 %v572, %v573
        %s575 = scalar_lea.vmem %s174, 384 [#allocation5]
        %v576 = vld [vmem:[%s575] sm:$0xff]
        %v577 = vld [vmem:[%s575 + $0x8] sm:$0xff]
        %v578 = vld [vmem:[%s575 + $0x10] sm:$0xff]
        %v579 = vld [vmem:[%s575 + $0x18] sm:$0xff]
        %v580 = vld [vmem:[%s575 + $0x20] sm:$0xff]
        %v581 = vld [vmem:[%s575 + $0x28] sm:$0xff]
        %v582 = vld [vmem:[%s575 + $0x30] sm:$0xff]
        %v583 = vld [vmem:[%s575 + $0x38] sm:$0xff]
        %v584 = vld [vmem:[%s575 + $0x40] sm:$0xff]
        %v585 = vld [vmem:[%s575 + $0x48] sm:$0xff]
        %v586 = vld [vmem:[%s575 + $0x50] sm:$0xff]
        %v587 = vld [vmem:[%s575 + $0x58] sm:$0xff]
        %v588 = vld [vmem:[%s575 + $0x60] sm:$0xff]
        %v589 = vld [vmem:[%s575 + $0x68] sm:$0xff]
        %v590 = vld [vmem:[%s575 + $0x70] sm:$0xff]
        %v591 = vld [vmem:[%s575 + $0x78] sm:$0xff]
        %v592 = vmul.f32 %v215, %v576
        %v593 = vmul.f32 %v216, %v577
        %v594 = vmul.f32 %v217, %v578
        %v595 = vmul.f32 %v218, %v579
        %v596 = vmul.f32 %v219, %v580
        %v597 = vmul.f32 %v220, %v581
        %v598 = vmul.f32 %v221, %v582
        %v599 = vmul.f32 %v222, %v583
        %v600 = vmul.f32 %v223, %v584
        %v601 = vmul.f32 %v224, %v585
        %v602 = vmul.f32 %v225, %v586
        %v603 = vmul.f32 %v226, %v587
        %v604 = vmul.f32 %v227, %v588
        %v605 = vmul.f32 %v228, %v589
        %v606 = vmul.f32 %v229, %v590
        %v607 = vmul.f32 %v230, %v591
        %v608 = vadd.f32 %v592, %v593
        %v609 = vadd.f32 %v608, %v594
        %v610 = vadd.f32 %v609, %v595
        %v611 = vadd.f32 %v610, %v596
        %v612 = vadd.f32 %v611, %v597
        %v613 = vadd.f32 %v612, %v598
        %v614 = vadd.f32 %v613, %v599
        %v615 = vadd.f32 %v614, %v600
        %v616 = vadd.f32 %v615, %v601
        %v617 = vadd.f32 %v616, %v602
        %v618 = vadd.f32 %v617, %v603
        %v619 = vadd.f32 %v618, %v604
        %v620 = vadd.f32 %v619, %v605
        %v621 = vadd.f32 %v620, %v606
        %v622 = vadd.f32 %v621, %v607
        %v623 = vrot.slane %v622, 4
        %v624 = vadd.f32 %v622, %v623
        %v625 = vrot.slane %v624, 2
        %v626 = vadd.f32 %v624, %v625
        %v627 = vrot.slane %v626, 1
        %v628 = vadd.f32 %v626, %v627
        %v629 = vmul.f32 %v306, %v306
        %v630 = vmul.f32 %v307, %v307
        %v631 = vmul.f32 %v308, %v308
        %v632 = vmul.f32 %v309, %v309
        %v633 = vmul.f32 %v310, %v310
        %v634 = vmul.f32 %v311, %v311
        %v635 = vmul.f32 %v312, %v312
        %v636 = vmul.f32 %v313, %v313
        %v637 = vmul.f32 %v314, %v314
        %v638 = vmul.f32 %v315, %v315
        %v639 = vmul.f32 %v316, %v316
        %v640 = vmul.f32 %v317, %v317
        %v641 = vmul.f32 %v318, %v318
        %v642 = vmul.f32 %v319, %v319
        %v643 = vmul.f32 %v320, %v320
        %v644 = vmul.f32 %v321, %v321
        %v645 = vadd.f32 %v629, %v630
        %v646 = vadd.f32 %v645, %v631
        %v647 = vadd.f32 %v646, %v632
        %v648 = vadd.f32 %v647, %v633
        %v649 = vadd.f32 %v648, %v634
        %v650 = vadd.f32 %v649, %v635
        %v651 = vadd.f32 %v650, %v636
        %v652 = vadd.f32 %v651, %v637
        %v653 = vadd.f32 %v652, %v638
        %v654 = vadd.f32 %v653, %v639
        %v655 = vadd.f32 %v654, %v640
        %v656 = vadd.f32 %v655, %v641
        %v657 = vadd.f32 %v656, %v642
        %v658 = vadd.f32 %v657, %v643
        %v659 = vadd.f32 %v658, %v644
        %v660 = vrot.slane %v659, 4
        %v661 = vadd.f32 %v659, %v660
        %v662 = vrot.slane %v661, 2
        %v663 = vadd.f32 %v661, %v662
        %v664 = vrot.slane %v663, 1
        %v665 = vadd.f32 %v663, %v664
        %v666 = vmul.f32 %v360, %v360
        %v667 = vmul.f32 %v361, %v361
        %v668 = vmul.f32 %v362, %v362
        %v669 = vmul.f32 %v363, %v363
        %v670 = vmul.f32 %v364, %v364
        %v671 = vmul.f32 %v365, %v365
        %v672 = vmul.f32 %v366, %v366
        %v673 = vmul.f32 %v367, %v367
        %v674 = vmul.f32 %v368, %v368
        %v675 = vmul.f32 %v369, %v369
        %v676 = vmul.f32 %v370, %v370
        %v677 = vmul.f32 %v371, %v371
        %v678 = vmul.f32 %v372, %v372
        %v679 = vmul.f32 %v373, %v373
        %v680 = vmul.f32 %v374, %v374
        %v681 = vmul.f32 %v375, %v375
        %v682 = vadd.f32 %v666, %v667
        %v683 = vadd.f32 %v682, %v668
        %v684 = vadd.f32 %v683, %v669
        %v685 = vadd.f32 %v684, %v670
        %v686 = vadd.f32 %v685, %v671
        %v687 = vadd.f32 %v686, %v672
        %v688 = vadd.f32 %v687, %v673
        %v689 = vadd.f32 %v688, %v674
        %v690 = vadd.f32 %v689, %v675
        %v691 = vadd.f32 %v690, %v676
        %v692 = vadd.f32 %v691, %v677
        %v693 = vadd.f32 %v692, %v678
        %v694 = vadd.f32 %v693, %v679
        %v695 = vadd.f32 %v694, %v680
        %v696 = vadd.f32 %v695, %v681
        %v697 = vrot.slane %v696, 4
        %v698 = vadd.f32 %v696, %v697
        %v699 = vrot.slane %v698, 2
        %v700 = vadd.f32 %v698, %v699
        %v701 = vrot.slane %v700, 1
        %v702 = vadd.f32 %v700, %v701
        %v703 = vmul.f32 %v306, %v414
        %v704 = vmul.f32 %v307, %v415
        %v705 = vmul.f32 %v308, %v416
        %v706 = vmul.f32 %v309, %v417
        %v707 = vmul.f32 %v310, %v418
        %v708 = vmul.f32 %v311, %v419
        %v709 = vmul.f32 %v312, %v420
        %v710 = vmul.f32 %v313, %v421
        %v711 = vmul.f32 %v314, %v422
        %v712 = vmul.f32 %v315, %v423
        %v713 = vmul.f32 %v316, %v424
        %v714 = vmul.f32 %v317, %v425
        %v715 = vmul.f32 %v318, %v426
        %v716 = vmul.f32 %v319, %v427
        %v717 = vmul.f32 %v320, %v428
        %v718 = vmul.f32 %v321, %v429
        %v719 = vadd.f32 %v703, %v704
        %v720 = vadd.f32 %v719, %v705
        %v721 = vadd.f32 %v720, %v706
        %v722 = vadd.f32 %v721, %v707
        %v723 = vadd.f32 %v722, %v708
        %v724 = vadd.f32 %v723, %v709
        %v725 = vadd.f32 %v724, %v710
        %v726 = vadd.f32 %v725, %v711
        %v727 = vadd.f32 %v726, %v712
        %v728 = vadd.f32 %v727, %v713
        %v729 = vadd.f32 %v728, %v714
        %v730 = vadd.f32 %v729, %v715
        %v731 = vadd.f32 %v730, %v716
        %v732 = vadd.f32 %v731, %v717
        %v733 = vadd.f32 %v732, %v718
        %v734 = vrot.slane %v733, 4
        %v735 = vadd.f32 %v733, %v734
        %v736 = vrot.slane %v735, 2
        %v737 = vadd.f32 %v735, %v736
        %v738 = vrot.slane %v737, 1
        %v739 = vadd.f32 %v737, %v738
        %v740 = vmul.f32 %v360, %v468
        %v741 = vmul.f32 %v361, %v469
        %v742 = vmul.f32 %v362, %v470
        %v743 = vmul.f32 %v363, %v471
        %v744 = vmul.f32 %v364, %v472
        %v745 = vmul.f32 %v365, %v473
        %v746 = vmul.f32 %v366, %v474
        %v747 = vmul.f32 %v367, %v475
        %v748 = vmul.f32 %v368, %v476
        %v749 = vmul.f32 %v369, %v477
        %v750 = vmul.f32 %v370, %v478
        %v751 = vmul.f32 %v371, %v479
        %v752 = vmul.f32 %v372, %v480
        %v753 = vmul.f32 %v373, %v481
        %v754 = vmul.f32 %v374, %v482
        %v755 = vmul.f32 %v375, %v483
        %v756 = vadd.f32 %v740, %v741
        %v757 = vadd.f32 %v756, %v742
        %v758 = vadd.f32 %v757, %v743
        %v759 = vadd.f32 %v758, %v744
        %v760 = vadd.f32 %v759, %v745
        %v761 = vadd.f32 %v760, %v746
        %v762 = vadd.f32 %v761, %v747
        %v763 = vadd.f32 %v762, %v748
        %v764 = vadd.f32 %v763, %v749
        %v765 = vadd.f32 %v764, %v750
        %v766 = vadd.f32 %v765, %v751
        %v767 = vadd.f32 %v766, %v752
        %v768 = vadd.f32 %v767, %v753
        %v769 = vadd.f32 %v768, %v754
        %v770 = vadd.f32 %v769, %v755
        %v771 = vrot.slane %v770, 4
        %v772 = vadd.f32 %v770, %v771
        %v773 = vrot.slane %v772, 2
        %v774 = vadd.f32 %v772, %v773
        %v775 = vrot.slane %v774, 1
        %v776 = vadd.f32 %v774, %v775
        %v777 = vmul.f32 %v306, %v522
        %v778 = vmul.f32 %v307, %v523
        %v779 = vmul.f32 %v308, %v524
        %v780 = vmul.f32 %v309, %v525
        %v781 = vmul.f32 %v310, %v526
        %v782 = vmul.f32 %v311, %v527
        %v783 = vmul.f32 %v312, %v528
        %v784 = vmul.f32 %v313, %v529
        %v785 = vmul.f32 %v314, %v530
        %v786 = vmul.f32 %v315, %v531
        %v787 = vmul.f32 %v316, %v532
        %v788 = vmul.f32 %v317, %v533
        %v789 = vmul.f32 %v318, %v534
        %v790 = vmul.f32 %v319, %v535
        %v791 = vmul.f32 %v320, %v536
        %v792 = vmul.f32 %v321, %v537
        %v793 = vadd.f32 %v777, %v778
        %v794 = vadd.f32 %v793, %v779
        %v795 = vadd.f32 %v794, %v780
        %v796 = vadd.f32 %v795, %v781
        %v797 = vadd.f32 %v796, %v782
        %v798 = vadd.f32 %v797, %v783
        %v799 = vadd.f32 %v798, %v784
        %v800 = vadd.f32 %v799, %v785
        %v801 = vadd.f32 %v800, %v786
        %v802 = vadd.f32 %v801, %v787
        %v803 = vadd.f32 %v802, %v788
        %v804 = vadd.f32 %v803, %v789
        %v805 = vadd.f32 %v804, %v790
        %v806 = vadd.f32 %v805, %v791
        %v807 = vadd.f32 %v806, %v792
        %v808 = vrot.slane %v807, 4
        %v809 = vadd.f32 %v807, %v808
        %v810 = vrot.slane %v809, 2
        %v811 = vadd.f32 %v809, %v810
        %v812 = vrot.slane %v811, 1
        %v813 = vadd.f32 %v811, %v812
        %v814 = vmul.f32 %v360, %v576
        %v815 = vmul.f32 %v361, %v577
        %v816 = vmul.f32 %v362, %v578
        %v817 = vmul.f32 %v363, %v579
        %v818 = vmul.f32 %v364, %v580
        %v819 = vmul.f32 %v365, %v581
        %v820 = vmul.f32 %v366, %v582
        %v821 = vmul.f32 %v367, %v583
        %v822 = vmul.f32 %v368, %v584
        %v823 = vmul.f32 %v369, %v585
        %v824 = vmul.f32 %v370, %v586
        %v825 = vmul.f32 %v371, %v587
        %v826 = vmul.f32 %v372, %v588
        %v827 = vmul.f32 %v373, %v589
        %v828 = vmul.f32 %v374, %v590
        %v829 = vmul.f32 %v375, %v591
        %v830 = vadd.f32 %v814, %v815
        %v831 = vadd.f32 %v830, %v816
        %v832 = vadd.f32 %v831, %v817
        %v833 = vadd.f32 %v832, %v818
        %v834 = vadd.f32 %v833, %v819
        %v835 = vadd.f32 %v834, %v820
        %v836 = vadd.f32 %v835, %v821
        %v837 = vadd.f32 %v836, %v822
        %v838 = vadd.f32 %v837, %v823
        %v839 = vadd.f32 %v838, %v824
        %v840 = vadd.f32 %v839, %v825
        %v841 = vadd.f32 %v840, %v826
        %v842 = vadd.f32 %v841, %v827
        %v843 = vadd.f32 %v842, %v828
        %v844 = vadd.f32 %v843, %v829
        %v845 = vrot.slane %v844, 4
        %v846 = vadd.f32 %v844, %v845
        %v847 = vrot.slane %v846, 2
        %v848 = vadd.f32 %v846, %v847
        %v849 = vrot.slane %v848, 1
        %v850 = vadd.f32 %v848, %v849
        %v851 = vmul.f32 %v414, %v414
        %v852 = vmul.f32 %v415, %v415
        %v853 = vmul.f32 %v416, %v416
        %v854 = vmul.f32 %v417, %v417
        %v855 = vmul.f32 %v418, %v418
        %v856 = vmul.f32 %v419, %v419
        %v857 = vmul.f32 %v420, %v420
        %v858 = vmul.f32 %v421, %v421
        %v859 = vmul.f32 %v422, %v422
        %v860 = vmul.f32 %v423, %v423
        %v861 = vmul.f32 %v424, %v424
        %v862 = vmul.f32 %v425, %v425
        %v863 = vmul.f32 %v426, %v426
        %v864 = vmul.f32 %v427, %v427
        %v865 = vmul.f32 %v428, %v428
        %v866 = vmul.f32 %v429, %v429
        %v867 = vadd.f32 %v851, %v852
        %v868 = vadd.f32 %v867, %v853
        %v869 = vadd.f32 %v868, %v854
        %v870 = vadd.f32 %v869, %v855
        %v871 = vadd.f32 %v870, %v856
        %v872 = vadd.f32 %v871, %v857
        %v873 = vadd.f32 %v872, %v858
        %v874 = vadd.f32 %v873, %v859
        %v875 = vadd.f32 %v874, %v860
        %v876 = vadd.f32 %v875, %v861
        %v877 = vadd.f32 %v876, %v862
        %v878 = vadd.f32 %v877, %v863
        %v879 = vadd.f32 %v878, %v864
        %v880 = vadd.f32 %v879, %v865
        %v881 = vadd.f32 %v880, %v866
        %v882 = vrot.slane %v881, 4
        %v883 = vadd.f32 %v881, %v882
        %v884 = vrot.slane %v883, 2
        %v885 = vadd.f32 %v883, %v884
        %v886 = vrot.slane %v885, 1
        %v887 = vadd.f32 %v885, %v886
        %v888 = vmul.f32 %v468, %v468
        %v889 = vmul.f32 %v469, %v469
        %v890 = vmul.f32 %v470, %v470
        %v891 = vmul.f32 %v471, %v471
        %v892 = vmul.f32 %v472, %v472
        %v893 = vmul.f32 %v473, %v473
        %v894 = vmul.f32 %v474, %v474
        %v895 = vmul.f32 %v475, %v475
        %v896 = vmul.f32 %v476, %v476
        %v897 = vmul.f32 %v477, %v477
        %v898 = vmul.f32 %v478, %v478
        %v899 = vmul.f32 %v479, %v479
        %v900 = vmul.f32 %v480, %v480
        %v901 = vmul.f32 %v481, %v481
        %v902 = vmul.f32 %v482, %v482
        %v903 = vmul.f32 %v483, %v483
        %v904 = vadd.f32 %v888, %v889
        %v905 = vadd.f32 %v904, %v890
        %v906 = vadd.f32 %v905, %v891
        %v907 = vadd.f32 %v906, %v892
        %v908 = vadd.f32 %v907, %v893
        %v909 = vadd.f32 %v908, %v894
        %v910 = vadd.f32 %v909, %v895
        %v911 = vadd.f32 %v910, %v896
        %v912 = vadd.f32 %v911, %v897
        %v913 = vadd.f32 %v912, %v898
        %v914 = vadd.f32 %v913, %v899
        %v915 = vadd.f32 %v914, %v900
        %v916 = vadd.f32 %v915, %v901
        %v917 = vadd.f32 %v916, %v902
        %v918 = vadd.f32 %v917, %v903
        %v919 = vrot.slane %v918, 4
        %v920 = vadd.f32 %v918, %v919
        %v921 = vrot.slane %v920, 2
        %v922 = vadd.f32 %v920, %v921
        %v923 = vrot.slane %v922, 1
        %v924 = vadd.f32 %v922, %v923
        %v925 = vmul.f32 %v414, %v522
        %v926 = vmul.f32 %v415, %v523
        %v927 = vmul.f32 %v416, %v524
        %v928 = vmul.f32 %v417, %v525
        %v929 = vmul.f32 %v418, %v526
        %v930 = vmul.f32 %v419, %v527
        %v931 = vmul.f32 %v420, %v528
        %v932 = vmul.f32 %v421, %v529
        %v933 = vmul.f32 %v422, %v530
        %v934 = vmul.f32 %v423, %v531
        %v935 = vmul.f32 %v424, %v532
        %v936 = vmul.f32 %v425, %v533
        %v937 = vmul.f32 %v426, %v534
        %v938 = vmul.f32 %v427, %v535
        %v939 = vmul.f32 %v428, %v536
        %v940 = vmul.f32 %v429, %v537
        %v941 = vadd.f32 %v925, %v926
        %v942 = vadd.f32 %v941, %v927
        %v943 = vadd.f32 %v942, %v928
        %v944 = vadd.f32 %v943, %v929
        %v945 = vadd.f32 %v944, %v930
        %v946 = vadd.f32 %v945, %v931
        %v947 = vadd.f32 %v946, %v932
        %v948 = vadd.f32 %v947, %v933
        %v949 = vadd.f32 %v948, %v934
        %v950 = vadd.f32 %v949, %v935
        %v951 = vadd.f32 %v950, %v936
        %v952 = vadd.f32 %v951, %v937
        %v953 = vadd.f32 %v952, %v938
        %v954 = vadd.f32 %v953, %v939
        %v955 = vadd.f32 %v954, %v940
        %v956 = vrot.slane %v955, 4
        %v957 = vadd.f32 %v955, %v956
        %v958 = vrot.slane %v957, 2
        %v959 = vadd.f32 %v957, %v958
        %v960 = vrot.slane %v959, 1
        %v961 = vadd.f32 %v959, %v960
        %v962 = vmul.f32 %v468, %v576
        %v963 = vmul.f32 %v469, %v577
        %v964 = vmul.f32 %v470, %v578
        %v965 = vmul.f32 %v471, %v579
        %v966 = vmul.f32 %v472, %v580
        %v967 = vmul.f32 %v473, %v581
        %v968 = vmul.f32 %v474, %v582
        %v969 = vmul.f32 %v475, %v583
        %v970 = vmul.f32 %v476, %v584
        %v971 = vmul.f32 %v477, %v585
        %v972 = vmul.f32 %v478, %v586
        %v973 = vmul.f32 %v479, %v587
        %v974 = vmul.f32 %v480, %v588
        %v975 = vmul.f32 %v481, %v589
        %v976 = vmul.f32 %v482, %v590
        %v977 = vmul.f32 %v483, %v591
        %v978 = vadd.f32 %v962, %v963
        %v979 = vadd.f32 %v978, %v964
        %v980 = vadd.f32 %v979, %v965
        %v981 = vadd.f32 %v980, %v966
        %v982 = vadd.f32 %v981, %v967
        %v983 = vadd.f32 %v982, %v968
        %v984 = vadd.f32 %v983, %v969
        %v985 = vadd.f32 %v984, %v970
        %v986 = vadd.f32 %v985, %v971
        %v987 = vadd.f32 %v986, %v972
        %v988 = vadd.f32 %v987, %v973
        %v989 = vadd.f32 %v988, %v974
        %v990 = vadd.f32 %v989, %v975
        %v991 = vadd.f32 %v990, %v976
        %v992 = vadd.f32 %v991, %v977
        %v993 = vrot.slane %v992, 4
        %v994 = vadd.f32 %v992, %v993
        %v995 = vrot.slane %v994, 2
        %v996 = vadd.f32 %v994, %v995
        %v997 = vrot.slane %v996, 1
        %v998 = vadd.f32 %v996, %v997
        %v999 = vmul.f32 %v522, %v522
        %v1000 = vmul.f32 %v523, %v523
        %v1001 = vmul.f32 %v524, %v524
        %v1002 = vmul.f32 %v525, %v525
        %v1003 = vmul.f32 %v526, %v526
        %v1004 = vmul.f32 %v527, %v527
        %v1005 = vmul.f32 %v528, %v528
        %v1006 = vmul.f32 %v529, %v529
        %v1007 = vmul.f32 %v530, %v530
        %v1008 = vmul.f32 %v531, %v531
        %v1009 = vmul.f32 %v532, %v532
        %v1010 = vmul.f32 %v533, %v533
        %v1011 = vmul.f32 %v534, %v534
        %v1012 = vmul.f32 %v535, %v535
        %v1013 = vmul.f32 %v536, %v536
        %v1014 = vmul.f32 %v537, %v537
        %v1015 = vadd.f32 %v999, %v1000
        %v1016 = vadd.f32 %v1015, %v1001
        %v1017 = vadd.f32 %v1016, %v1002
        %v1018 = vadd.f32 %v1017, %v1003
        %v1019 = vadd.f32 %v1018, %v1004
        %v1020 = vadd.f32 %v1019, %v1005
        %v1021 = vadd.f32 %v1020, %v1006
        %v1022 = vadd.f32 %v1021, %v1007
        %v1023 = vadd.f32 %v1022, %v1008
        %v1024 = vadd.f32 %v1023, %v1009
        %v1025 = vadd.f32 %v1024, %v1010
        %v1026 = vadd.f32 %v1025, %v1011
        %v1027 = vadd.f32 %v1026, %v1012
        %v1028 = vadd.f32 %v1027, %v1013
        %v1029 = vadd.f32 %v1028, %v1014
        %v1030 = vrot.slane %v1029, 4
        %v1031 = vadd.f32 %v1029, %v1030
        %v1032 = vrot.slane %v1031, 2
        %v1033 = vadd.f32 %v1031, %v1032
        %v1034 = vrot.slane %v1033, 1
        %v1035 = vadd.f32 %v1033, %v1034
        %v1036 = vmul.f32 %v576, %v576
        %v1037 = vmul.f32 %v577, %v577
        %v1038 = vmul.f32 %v578, %v578
        %v1039 = vmul.f32 %v579, %v579
        %v1040 = vmul.f32 %v580, %v580
        %v1041 = vmul.f32 %v581, %v581
        %v1042 = vmul.f32 %v582, %v582
        %v1043 = vmul.f32 %v583, %v583
        %v1044 = vmul.f32 %v584, %v584
        %v1045 = vmul.f32 %v585, %v585
        %v1046 = vmul.f32 %v586, %v586
        %v1047 = vmul.f32 %v587, %v587
        %v1048 = vmul.f32 %v588, %v588
        %v1049 = vmul.f32 %v589, %v589
        %v1050 = vmul.f32 %v590, %v590
        %v1051 = vmul.f32 %v591, %v591
        %v1052 = vadd.f32 %v1036, %v1037
        %v1053 = vadd.f32 %v1052, %v1038
        %v1054 = vadd.f32 %v1053, %v1039
        %v1055 = vadd.f32 %v1054, %v1040
        %v1056 = vadd.f32 %v1055, %v1041
        %v1057 = vadd.f32 %v1056, %v1042
        %v1058 = vadd.f32 %v1057, %v1043
        %v1059 = vadd.f32 %v1058, %v1044
        %v1060 = vadd.f32 %v1059, %v1045
        %v1061 = vadd.f32 %v1060, %v1046
        %v1062 = vadd.f32 %v1061, %v1047
        %v1063 = vadd.f32 %v1062, %v1048
        %v1064 = vadd.f32 %v1063, %v1049
        %v1065 = vadd.f32 %v1064, %v1050
        %v1066 = vadd.f32 %v1065, %v1051
        %v1067 = vrot.slane %v1066, 4
        %v1068 = vadd.f32 %v1066, %v1067
        %v1069 = vrot.slane %v1068, 2
        %v1070 = vadd.f32 %v1068, %v1069
        %v1071 = vrot.slane %v1070, 1
        %v1072 = vadd.f32 %v1070, %v1071
        %v1073 = vmul.f32 %v267, %v304
        %v1074 = vadd.f32 %v1073, 0.0
        %v1075 = vmul.f32 %v267, %v267
        %v1076 = vadd.f32 %v1075, 0.0
        %v1077 = vmul.f32 %v304, %v304
        %v1078 = vadd.f32 %v1077, 0.0
        %v1079 = vmul.f32 %v358, %v412
        %v1080 = vadd.f32 %v1074, %v1079
        %v1081 = vmul.f32 %v358, %v358
        %v1082 = vadd.f32 %v1076, %v1081
        %v1083 = vmul.f32 %v412, %v412
        %v1084 = vadd.f32 %v1078, %v1083
        %v1085 = vmul.f32 %v466, %v520
        %v1086 = vadd.f32 %v1080, %v1085
        %v1087 = vmul.f32 %v466, %v466
        %v1088 = vadd.f32 %v1082, %v1087
        %v1089 = vmul.f32 %v520, %v520
        %v1090 = vadd.f32 %v1084, %v1089
        %v1091 = vmul.f32 %v574, %v628
        %v1092 = vadd.f32 %v1086, %v1091
        %v1093 = vmul.f32 %v574, %v574
        %v1094 = vadd.f32 %v1088, %v1093
        %v1095 = vmul.f32 %v628, %v628
        %v1096 = vadd.f32 %v1090, %v1095
        %v1097 = vadd.f32 %v1092, %v1079
        %v1098 = vadd.f32 %v1094, %v1081
        %v1099 = vadd.f32 %v1096, %v1083
        %v1100 = vmul.f32 %v665, %v702
        %v1101 = vadd.f32 %v1097, %v1100
        %v1102 = vmul.f32 %v665, %v665
        %v1103 = vadd.f32 %v1098, %v1102
        %v1104 = vmul.f32 %v702, %v702
        %v1105 = vadd.f32 %v1099, %v1104
        %v1106 = vmul.f32 %v739, %v776
        %v1107 = vadd.f32 %v1101, %v1106
        %v1108 = vmul.f32 %v739, %v739
        %v1109 = vadd.f32 %v1103, %v1108
        %v1110 = vmul.f32 %v776, %v776
        %v1111 = vadd.f32 %v1105, %v1110
        %v1112 = vmul.f32 %v813, %v850
        %v1113 = vadd.f32 %v1107, %v1112
        %v1114 = vmul.f32 %v813, %v813
        %v1115 = vadd.f32 %v1109, %v1114
        %v1116 = vmul.f32 %v850, %v850
        %v1117 = vadd.f32 %v1111, %v1116
        %v1118 = vadd.f32 %v1113, %v1085
        %v1119 = vadd.f32 %v1115, %v1087
        %v1120 = vadd.f32 %v1117, %v1089
        %v1121 = vadd.f32 %v1118, %v1106
        %v1122 = vadd.f32 %v1119, %v1108
        %v1123 = vadd.f32 %v1120, %v1110
        %v1124 = vmul.f32 %v887, %v924
        %v1125 = vadd.f32 %v1121, %v1124
        %v1126 = vmul.f32 %v887, %v887
        %v1127 = vadd.f32 %v1122, %v1126
        %v1128 = vmul.f32 %v924, %v924
        %v1129 = vadd.f32 %v1123, %v1128
        %v1130 = vmul.f32 %v961, %v998
        %v1131 = vadd.f32 %v1125, %v1130
        %v1132 = vmul.f32 %v961, %v961
        %v1133 = vadd.f32 %v1127, %v1132
        %v1134 = vmul.f32 %v998, %v998
        %v1135 = vadd.f32 %v1129, %v1134
        %v1136 = vadd.f32 %v1131, %v1091
        %v1137 = vadd.f32 %v1133, %v1093
        %v1138 = vadd.f32 %v1135, %v1095
        %v1139 = vadd.f32 %v1136, %v1112
        %v1140 = vadd.f32 %v1137, %v1114
        %v1141 = vadd.f32 %v1138, %v1116
        %v1142 = vadd.f32 %v1139, %v1130
        %v1143 = vadd.f32 %v1140, %v1132
        %v1144 = vadd.f32 %v1141, %v1134
        %v1145 = vmul.f32 %v1035, %v1072
        %v1146 = vadd.f32 %v1142, %v1145
        %v1147 = vmul.f32 %v1035, %v1035
        %v1148 = vadd.f32 %v1143, %v1147
        %v1149 = vmul.f32 %v1072, %v1072
        %v1150 = vadd.f32 %v1144, %v1149
        %v1151 = vmul.f32 %v1148, %v1150
        %v1152 = vrsqrt.pop %v1151
        %v1153 = vmul.f32 %v1146, %v1152
        %1154 = vst [vmem:[%s198] sm:$0x1] %v1153
        %s1155 = sand.u32 %s82, 1
        %s1156 = scalar_lea.sflag [#allocation4], %s1155
        %s1157 = sand.u32 %s82, 1
        %s1158 = scalar_lea.vmem [#allocation7], %s1157
        // Predicated region
        $region37: #{tpu_custom_call.1} parent=27 // pred_check
          %p1159 = pneg %p92
        $region38: #{tpu_custom_call.1} parent=27 // pred_check_branch
          %1161 = sbr.rel (%p1159) target = $region40
        $region39: #{tpu_custom_call.1} parent=27 // pred_region
          %s1163 = ssub.s32 16, 16
          %1164 = vsyncadd %s1156, %s1163
          %s1165 = smul.addr %s22, 16
          %s1166 = scalar_lea.hbm %s2, %s1165
          %s1168 = sshll.u32 %s1158, 4
          %s1169 = int_to_ptr.vmem [resolvable:$true] %s1168
          %1171 = dma.vmem_to_hbm [thread:$0]  %s1169, 16, %s1166, %s1156
        $region40: #{tpu_custom_call.1} parent=27 // pred_fallthru
          _
      $region28: #{tpu_custom_call.1} parent=5 // pred_fallthru
        _
      %p1172 = scmp.le.s32.totalorder 2, %s17
      // Predicated region
      $region41: #{tpu_custom_call.1} parent=5 // pred_check
        %p1173 = pneg %p1172
      $region42: #{tpu_custom_call.1} parent=5 // pred_check_branch
        %1175 = sbr.rel (%p1173) target = $region44
      $region43: #{tpu_custom_call.1} parent=5 // pred_region
        %s1176 = ssub.s32 %s17, 2
        // Predicated region
        $region45: #{tpu_custom_call.1} parent=43 // pred_check
          %p1177 = pneg %p98
        $region46: #{tpu_custom_call.1} parent=43 // pred_check_branch
          %1179 = sbr.rel (%p1177) target = $region48
        $region47: #{tpu_custom_call.1} parent=43 // pred_region
          %s1180 = sand.u32 %s83, 1
          %s1181 = scalar_lea.sflag [#allocation4], %s1180
          %s1182 = sand.u32 %s83, 1
          %s1183 = scalar_lea.vmem [#allocation7], %s1182
          %1184 = dma.done %s1181, 16
        $region48: #{tpu_custom_call.1} parent=43 // pred_fallthru
          _
      $region44: #{tpu_custom_call.1} parent=5 // pred_fallthru
        _
    $region6: #{tpu_custom_call.1} parent=1 // loop_footer
      %s21 = sadd.s32 1, %s17
    $region7: #{tpu_custom_call.1} parent=1 // loop_footer_branch
      %16 = sbr.rel target = $region3
    $region8: #{tpu_custom_call.1} parent=1 // loop_exit
      _
    %1185 = vsyncpa [#allocation3], 1
    %s1186 = scalar_lea.sflag [#allocation3], 1
    %1187 = vsyncpa %s1186, 1
    %1188 = vsyncpa [#allocation6], 1
    %s1189 = scalar_lea.sflag [#allocation6], 1
    %1190 = vsyncpa %s1189, 1
    %1191 = vsyncpa [#allocation4], 1
    %s1192 = scalar_lea.sflag [#allocation4], 1
    %1193 = vsyncpa %s1192, 1

</llo_original>
